<compile_context>
chip_gen: v7x
topology: tpu7x:2x2x1
jax: 0.10.0
libtpu: 0.0.40
codegen_flags: <defaults>
</compile_context>

<pallas_src>
import jax
import jax.numpy as jnp
from jax.experimental import pallas as pl
from jax.experimental.pallas import tpu as pltpu

IN_FEATURES = 3 * 28 * 28          # 2352 (multiple of 8, not of 128 -> full-dim block)
HIDDEN = 100
OUT_FEATURES = 10

LANE = 128
H_PAD = LANE                       # 128
OUT_PAD = LANE                     # 128
NEG_BIG = -1e30


def _cdiv(a, b):
    return -(-a // b)


def _round_up(n, m):
    return ((n + m - 1) // m) * m


def _classifier_kernel(x_ref, w1_ref, b1_ref, w2_ref, b2_ref, w3_ref, b3_ref,
                       o_ref):
    # x: (TB, 2352) f32, cast to bf16 in-kernel; weights bf16; biases f32;
    # all matmuls accumulate in f32.
    x = x_ref[...].astype(jnp.bfloat16)

    h1 = jnp.dot(x, w1_ref[...], preferred_element_type=jnp.float32) + b1_ref[...]
    h1 = jnp.maximum(h1, 0.0)                               # f32 (TB, H_PAD)

    h2 = jnp.dot(h1.astype(jnp.bfloat16), w2_ref[...],
                 preferred_element_type=jnp.float32) + b2_ref[...]
    h2 = jnp.maximum(h2, 0.0)                               # f32 (TB, H_PAD)

    logits = jnp.dot(h2.astype(jnp.bfloat16), w3_ref[...],
                     preferred_element_type=jnp.float32) + b3_ref[...]

    # Mask the 118 padded class lanes so they don't contaminate the softmax.
    lane = jax.lax.broadcasted_iota(jnp.int32, logits.shape, dimension=1)
    logits = jnp.where(lane < OUT_FEATURES, logits, NEG_BIG)

    # Numerically-stable softmax along the class (lane) axis, f32.
    # Exact divide (not approx reciprocal) so rows sum to 1 to f32 precision.
    m = jnp.max(logits, axis=-1, keepdims=True)
    e = jnp.exp(logits - m)
    denom = jnp.sum(e, axis=-1, keepdims=True)
    o_ref[...] = (e / denom).astype(o_ref.dtype)


def pad_params(params):
    """Pad logical (in, out) f32 params to lane multiples on the *output* dims
    only (the contraction dim of w1 stays at 2352 to match unpadded x rows);
    weights -> bf16, biases stay f32."""
    w1, b1, w2, b2, w3, b3 = params
    w1p = jnp.zeros((IN_FEATURES, H_PAD), jnp.bfloat16).at[:, :HIDDEN].set(
        w1.astype(jnp.bfloat16))
    b1p = jnp.zeros((1, H_PAD), jnp.float32).at[:, :HIDDEN].set(b1)
    w2p = jnp.zeros((H_PAD, H_PAD), jnp.bfloat16).at[:HIDDEN, :HIDDEN].set(
        w2.astype(jnp.bfloat16))
    b2p = jnp.zeros((1, H_PAD), jnp.float32).at[:, :HIDDEN].set(b2)
    w3p = jnp.zeros((H_PAD, OUT_PAD), jnp.bfloat16).at[:HIDDEN, :OUT_FEATURES].set(
        w3.astype(jnp.bfloat16))
    b3p = jnp.zeros((1, OUT_PAD), jnp.float32).at[:, :OUT_FEATURES].set(b3)
    return (w1p, b1p, w2p, b2p, w3p, b3p)


def classifier_forward(x, padded_params, tb=512):
    """x: (B, 2352) f32 -> (B, 10) f32 softmax probabilities."""
    w1p, b1p, w2p, b2p, w3p, b3p = padded_params
    B = x.shape[0]

    # Tile selection:
    #   * cap the requested tile at 1024 rows (VMEM budget below),
    #   * force >= 2 grid steps when B permits (v7x: both TensorCores active),
    #   * size the tile to the actual B in multiples of 16 to limit padding waste.
    tb = max(16, min(int(tb), 1024))
    n_tiles = max(_cdiv(B, tb), 2 if B >= 32 else 1)
    tb_eff = _round_up(_cdiv(B, n_tiles), 16)
    b_pad = _round_up(B, tb_eff)
    grid = (b_pad // tb_eff,)

    # Only a (cheap) batch-row pad; no dtype cast / feature pad over x.
    x_p = x if b_pad == B else jnp.pad(x, ((0, b_pad - B), (0, 0)))

    const = lambda i: (0, 0)   # weights/biases stay VMEM-resident across the grid
    out = pl.pallas_call(
        _classifier_kernel,
        out_shape=jax.ShapeDtypeStruct((b_pad, OUT_PAD), jnp.float32),
        grid=grid,
        in_specs=[
            pl.BlockSpec((tb_eff, IN_FEATURES), lambda i: (i, 0)),  # x tiles (full rows)
            pl.BlockSpec((IN_FEATURES, H_PAD), const),              # w1
            pl.BlockSpec((1, H_PAD), const),                        # b1
            pl.BlockSpec((H_PAD, H_PAD), const),                    # w2
            pl.BlockSpec((1, H_PAD), const),                        # b2
            pl.BlockSpec((H_PAD, OUT_PAD), const),                  # w3
            pl.BlockSpec((1, OUT_PAD), const),                      # b3
        ],
        out_specs=pl.BlockSpec((tb_eff, OUT_PAD), lambda i: (i, 0)),
        compiler_params=pltpu.CompilerParams(
            dimension_semantics=("parallel",),
            vmem_limit_bytes=32 * 1024 * 1024),
    )(x_p, w1p, b1p, w2p, b2p, w3p, b3p)

    return out[:B, :OUT_FEATURES]


def init_params(key):
    """Deterministic synthetic params in the logical nn.Linear shapes ((in, out))."""
    k1, k2, k3 = jax.random.split(key, 3)
    w1 = jax.random.normal(k1, (IN_FEATURES, HIDDEN), jnp.float32) * 0.02
    b1 = jnp.zeros((1, HIDDEN), jnp.float32)
    w2 = jax.random.normal(k2, (HIDDEN, HIDDEN), jnp.float32) * 0.1
    b2 = jnp.full((1, HIDDEN), 0.01, jnp.float32)
    w3 = jax.random.normal(k3, (HIDDEN, OUT_FEATURES), jnp.float32) * 0.1
    b3 = jnp.zeros((1, OUT_FEATURES), jnp.float32)
    return (w1, b1, w2, b2, w3, b3)


def _reference_forward(x, params):
    """Pure-JAX reference mirroring the kernel's dtype path (bf16 operands, f32 acc)."""
    w1, b1, w2, b2, w3, b3 = params
    bf = jnp.bfloat16
    h1 = jnp.maximum(jnp.dot(x.astype(bf), w1.astype(bf),
                             preferred_element_type=jnp.float32) + b1, 0.0)
    h2 = jnp.maximum(jnp.dot(h1.astype(bf), w2.astype(bf),
                             preferred_element_type=jnp.float32) + b2, 0.0)
    logits = jnp.dot(h2.astype(bf), w3.astype(bf),
                     preferred_element_type=jnp.float32) + b3
    return jax.nn.softmax(logits, axis=1)


if __name__ == "__main__":
    key = jax.random.PRNGKey(0)
    kx, kp = jax.random.split(key)

    B = 48  # small demo batch (production: hundreds+; default tile 512)
    x = jax.random.normal(kx, (B, IN_FEATURES), jnp.float32)
    params = init_params(kp)
    padded = pad_params(params)
    ref = _reference_forward(x, params)

    # 1) default tile -> 2 grid steps of 32 rows (exercises batch padding 48->64)
    out_a = jax.block_until_ready(classifier_forward(x, padded))
    # 2) small tile -> 3 grid steps of 16 rows (exercises resident-weight reuse)
    out_b = jax.block_until_ready(classifier_forward(x, padded, tb=16))

    for out in (out_a, out_b):
        assert out.shape == (B, OUT_FEATURES)
        assert jnp.allclose(jnp.sum(out, axis=1), 1.0, atol=1e-4)
        assert jnp.allclose(out, ref, atol=2e-3, rtol=2e-3)
    assert jnp.allclose(out_a, out_b, atol=1e-6)

    print("KERNEL_OK")
</pallas_src>

<mosaic_0001>
module attributes {stable_mosaic.version = 11 : i64} {
  func.func @_classifier_kernel(%arg0: i32, %arg1: memref<32x2352xf32, #tpu.memory_space<vmem>>, %arg2: memref<2352x128xbf16, #tpu.memory_space<vmem>>, %arg3: memref<1x128xf32, #tpu.memory_space<vmem>>, %arg4: memref<128x128xbf16, #tpu.memory_space<vmem>>, %arg5: memref<1x128xf32, #tpu.memory_space<vmem>>, %arg6: memref<128x128xbf16, #tpu.memory_space<vmem>>, %arg7: memref<1x128xf32, #tpu.memory_space<vmem>>, %arg8: memref<32x128xf32, #tpu.memory_space<vmem>>) attributes {dimension_semantics = [#tpu.dimension_semantics<parallel>], iteration_bounds = array<i64: 2>, scalar_prefetch = 0 : i64, scratch_operands = 0 : i64, tpu.core_type = #tpu.core_type<tc>, window_params = [{transform_indices = @transform_0, window_bounds = array<i64: 32, 2352>}, {pipeline_mode = #tpu.pipeline_mode<synchronous>, transform_indices = @transform_1, window_bounds = array<i64: 2352, 128>}, {pipeline_mode = #tpu.pipeline_mode<synchronous>, transform_indices = @transform_2, window_bounds = array<i64: 1, 128>}, {pipeline_mode = #tpu.pipeline_mode<synchronous>, transform_indices = @transform_3, window_bounds = array<i64: 128, 128>}, {pipeline_mode = #tpu.pipeline_mode<synchronous>, transform_indices = @transform_4, window_bounds = array<i64: 1, 128>}, {pipeline_mode = #tpu.pipeline_mode<synchronous>, transform_indices = @transform_5, window_bounds = array<i64: 128, 128>}, {pipeline_mode = #tpu.pipeline_mode<synchronous>, transform_indices = @transform_6, window_bounds = array<i64: 1, 128>}, {transform_indices = @transform_7, window_bounds = array<i64: 32, 128>}]} {
    %c0 = arith.constant 0 : index
    %c0_0 = arith.constant 0 : index
    %0 = vector.load %arg1[%c0, %c0_0] : memref<32x2352xf32, #tpu.memory_space<vmem>>, vector<32x2352xf32>
    %1 = arith.truncf %0 : vector<32x2352xf32> to vector<32x2352xbf16>
    %c0_1 = arith.constant 0 : index
    %c0_2 = arith.constant 0 : index
    %2 = vector.load %arg2[%c0_1, %c0_2] : memref<2352x128xbf16, #tpu.memory_space<vmem>>, vector<2352x128xbf16>
    %cst = arith.constant dense<0.000000e+00> : vector<32x128xf32>
    %3 = tpu.matmul %1, %2, %cst {dimension_numbers = #tpu.dot_dimension_numbers<[1], [0], [0], [1], [0, 0, 1, 1], [], []>} : vector<32x2352xbf16>, vector<2352x128xbf16>, vector<32x128xf32> -> vector<32x128xf32>
    %c0_3 = arith.constant 0 : index
    %c0_4 = arith.constant 0 : index
    %4 = vector.load %arg3[%c0_3, %c0_4] : memref<1x128xf32, #tpu.memory_space<vmem>>, vector<1x128xf32>
    %5 = vector.broadcast %4 : vector<1x128xf32> to vector<32x128xf32>
    %6 = arith.addf %3, %5 : vector<32x128xf32>
    %cst_5 = arith.constant 0.000000e+00 : f32
    %7 = vector.broadcast %cst_5 : f32 to vector<32x128xf32>
    %8 = arith.maximumf %6, %7 : vector<32x128xf32>
    %9 = arith.truncf %8 : vector<32x128xf32> to vector<32x128xbf16>
    %c0_6 = arith.constant 0 : index
    %c0_7 = arith.constant 0 : index
    %10 = vector.load %arg4[%c0_6, %c0_7] : memref<128x128xbf16, #tpu.memory_space<vmem>>, vector<128x128xbf16>
    %cst_8 = arith.constant dense<0.000000e+00> : vector<32x128xf32>
    %11 = tpu.matmul %9, %10, %cst_8 {dimension_numbers = #tpu.dot_dimension_numbers<[1], [0], [0], [1], [0, 0, 1, 1], [], []>} : vector<32x128xbf16>, vector<128x128xbf16>, vector<32x128xf32> -> vector<32x128xf32>
    %c0_9 = arith.constant 0 : index
    %c0_10 = arith.constant 0 : index
    %12 = vector.load %arg5[%c0_9, %c0_10] : memref<1x128xf32, #tpu.memory_space<vmem>>, vector<1x128xf32>
    %13 = vector.broadcast %12 : vector<1x128xf32> to vector<32x128xf32>
    %14 = arith.addf %11, %13 : vector<32x128xf32>
    %cst_11 = arith.constant 0.000000e+00 : f32
    %15 = vector.broadcast %cst_11 : f32 to vector<32x128xf32>
    %16 = arith.maximumf %14, %15 : vector<32x128xf32>
    %17 = arith.truncf %16 : vector<32x128xf32> to vector<32x128xbf16>
    %c0_12 = arith.constant 0 : index
    %c0_13 = arith.constant 0 : index
    %18 = vector.load %arg6[%c0_12, %c0_13] : memref<128x128xbf16, #tpu.memory_space<vmem>>, vector<128x128xbf16>
    %cst_14 = arith.constant dense<0.000000e+00> : vector<32x128xf32>
    %19 = tpu.matmul %17, %18, %cst_14 {dimension_numbers = #tpu.dot_dimension_numbers<[1], [0], [0], [1], [0, 0, 1, 1], [], []>} : vector<32x128xbf16>, vector<128x128xbf16>, vector<32x128xf32> -> vector<32x128xf32>
    %c0_15 = arith.constant 0 : index
    %c0_16 = arith.constant 0 : index
    %20 = vector.load %arg7[%c0_15, %c0_16] : memref<1x128xf32, #tpu.memory_space<vmem>>, vector<1x128xf32>
    %21 = vector.broadcast %20 : vector<1x128xf32> to vector<32x128xf32>
    %22 = arith.addf %19, %21 : vector<32x128xf32>
    %23 = tpu.iota {dimensions = array<i32: 1>} : vector<32x128xi32>
    %c10_i32 = arith.constant 10 : i32
    %24 = vector.broadcast %c10_i32 : i32 to vector<32x128xi32>
    %25 = arith.cmpi slt, %23, %24 : vector<32x128xi32>
    %cst_17 = arith.constant -1.000000e+30 : f32
    %26 = vector.broadcast %cst_17 : f32 to vector<32x128xf32>
    %27 = arith.select %25, %22, %26 : vector<32x128xi1>, vector<32x128xf32>
    %cst_18 = arith.constant dense<0xFF800000> : vector<32xf32>
    %28 = vector.multi_reduction <maximumf>, %27, %cst_18 [1] : vector<32x128xf32> to vector<32xf32>
    %29 = vector.shape_cast %28 : vector<32xf32> to vector<32x1xf32>
    %30 = vector.broadcast %29 : vector<32x1xf32> to vector<32x128xf32>
    %31 = arith.subf %27, %30 : vector<32x128xf32>
    %32 = math.exp %31 : vector<32x128xf32>
    %cst_19 = arith.constant dense<0.000000e+00> : vector<32xf32>
    %33 = vector.multi_reduction <add>, %32, %cst_19 [1] : vector<32x128xf32> to vector<32xf32>
    %34 = vector.shape_cast %33 : vector<32xf32> to vector<32x1xf32>
    %35 = vector.broadcast %34 : vector<32x1xf32> to vector<32x128xf32>
    %36 = arith.divf %32, %35 : vector<32x128xf32>
    %c0_20 = arith.constant 0 : index
    %c0_21 = arith.constant 0 : index
    %37 = vector.load %arg8[%c0_20, %c0_21] : memref<32x128xf32, #tpu.memory_space<vmem>>, vector<32x128xf32>
    tpu.vector_store %arg8[%c0_20, %c0_21], %36 {strides = array<i32>} : memref<32x128xf32, #tpu.memory_space<vmem>>, vector<32x128xf32>,
    return
  }
  func.func @transform_0(%arg0: i32) -> (i32, i32) {
    %c0_i32 = arith.constant 0 : i32
    %c0_i32_0 = arith.constant 0 : i32
    return %arg0, %c0_i32 : i32, i32
  }
  func.func @transform_1(%arg0: i32) -> (i32, i32) {
    %c0_i32 = arith.constant 0 : i32
    %c0_i32_0 = arith.constant 0 : i32
    %c0_i32_1 = arith.constant 0 : i32
    return %c0_i32, %c0_i32_0 : i32, i32
  }
  func.func @transform_2(%arg0: i32) -> (i32, i32) {
    %c0_i32 = arith.constant 0 : i32
    %c0_i32_0 = arith.constant 0 : i32
    %c0_i32_1 = arith.constant 0 : i32
    return %c0_i32, %c0_i32_0 : i32, i32
  }
  func.func @transform_3(%arg0: i32) -> (i32, i32) {
    %c0_i32 = arith.constant 0 : i32
    %c0_i32_0 = arith.constant 0 : i32
    %c0_i32_1 = arith.constant 0 : i32
    return %c0_i32, %c0_i32_0 : i32, i32
  }
  func.func @transform_4(%arg0: i32) -> (i32, i32) {
    %c0_i32 = arith.constant 0 : i32
    %c0_i32_0 = arith.constant 0 : i32
    %c0_i32_1 = arith.constant 0 : i32
    return %c0_i32, %c0_i32_0 : i32, i32
  }
  func.func @transform_5(%arg0: i32) -> (i32, i32) {
    %c0_i32 = arith.constant 0 : i32
    %c0_i32_0 = arith.constant 0 : i32
    %c0_i32_1 = arith.constant 0 : i32
    return %c0_i32, %c0_i32_0 : i32, i32
  }
  func.func @transform_6(%arg0: i32) -> (i32, i32) {
    %c0_i32 = arith.constant 0 : i32
    %c0_i32_0 = arith.constant 0 : i32
    %c0_i32_1 = arith.constant 0 : i32
    return %c0_i32, %c0_i32_0 : i32, i32
  }
  func.func @transform_7(%arg0: i32) -> (i32, i32) {
    %c0_i32 = arith.constant 0 : i32
    %c0_i32_0 = arith.constant 0 : i32
    return %arg0, %c0_i32 : i32, i32
  }
}

</mosaic_0001>

<llo_original>
// kernel: tpu_custom_call.1
$region0: #{tpu_custom_call.1}
  #allocation0 [shape = 'u32[]', space=smem, size = 0x4, offset = 0x4, fixed_abs, tag = 'smem constant byte address 0x4 - core index']
  #allocation1 [shape = 'u32[144,128]{1,0:T(1,128)}', space=vmem, size = 0x12000, scoped, tag = 'internal scratch']
  %s0 = inlined_call_operand.hbm [shape: f32[64,2352], index: 0, kind: input, shape index: {}]
  %s1 = inlined_call_operand.hbm [shape: bf16[2352,128], index: 1, kind: input, shape index: {}]
  %s2 = inlined_call_operand.vmem [shape: f32[1,128], index: 2, kind: input, shape index: {}]
  %s3 = inlined_call_operand.hbm [shape: bf16[128,128], index: 3, kind: input, shape index: {}]
  %s4 = inlined_call_operand.vmem [shape: f32[1,128], index: 4, kind: input, shape index: {}]
  %s5 = inlined_call_operand.hbm [shape: bf16[128,128], index: 5, kind: input, shape index: {}]
  %s6 = inlined_call_operand.vmem [shape: f32[1,128], index: 6, kind: input, shape index: {}]
  %s7 = inlined_call_operand.hbm [shape: f32[64,128], index: 7, kind: output, shape index: {}]
  %s8 = sld [smem:[#allocation0]]
  $region77: #{tpu_custom_call.1} parent=0
    _
  %s10 = ssub.s32 1, %s8
  %s11 = scalar_select 0, %s10, %s8
  $region1: #{tpu_custom_call.1} parent=0
    #allocation2 [shape = 'u8[622592]{0}', space=vmem, size = 0x98000, scoped, tag = 'input window, operand 0']
    #allocation3 [shape = 's32[2]{0}', space=sflag, size = 0x8, scoped, tag = 'scoped memory for tpu_custom_call.1']
    #allocation4 [shape = 's32[2]{0}', space=sflag, size = 0x8, scoped, tag = 'scoped memory for tpu_custom_call.1']
    #allocation5 [shape = 'u8[602112]{0}', space=vmem, size = 0x93000, scoped, tag = 'input window, operand 1, single buffered']
    #allocation6 [shape = 's32[1]{0}', space=sflag, size = 0x4, scoped, tag = 'scoped memory for tpu_custom_call.1']
    #allocation7 [shape = 'u8[32768]{0}', space=vmem, size = 0x8000, scoped, tag = 'input window, operand 3, single buffered']
    #allocation8 [shape = 'u8[32768]{0}', space=vmem, size = 0x8000, scoped, tag = 'input window, operand 5, single buffered']
    #allocation9 [shape = 's32[1]{0}', space=sflag, size = 0x4, scoped, tag = 'scoped memory for tpu_custom_call.1']
    #allocation10 [shape = 'u8[32768]{0}', space=vmem, size = 0x8000, scoped, tag = 'output window, operand 0']
    %12 = vsyncpa [#allocation3], 0
    %s13 = scalar_lea.sflag [#allocation3], 1
    %14 = vsyncpa %s13, 0
    %15 = vsyncpa [#allocation6], 0
    %16 = vsyncpa [#allocation9], 0
    %17 = vsyncpa [#allocation4], 0
    %s18 = scalar_lea.sflag [#allocation4], 1
    %19 = vsyncpa %s18, 0
    loop: start=0, step=1, limit=4
    $region2: #{tpu_custom_call.1} parent=1 // loop_pre_header
      _
    $region3: #{tpu_custom_call.1} parent=1 // loop_header
      %s21 = sphi 0, %s25
      %p22 = scmp.ge.s32.totalorder %s21, 4
      %s31 = sphi 0, %s33
      %s34 = sphi 0, %s31
      %s35 = sphi 0, %s34
      %s51 = sphi 0, %s35
      %s55 = sphi 0, %s55
      %s57 = sphi 0, %s55
      %s58 = sphi 0, %s57
      %s72 = sphi 0, %s58
      %s76 = sphi 0, %s76
      %s78 = sphi 0, %s76
      %s79 = sphi 0, %s78
      %s93 = sphi 0, %s79
      %s97 = sphi 0, %s97
      %s99 = sphi 0, %s97
      %s100 = sphi 0, %s99
      %s114 = sphi 0, %s100
      %s118 = sphi 0, %s118
      %s120 = sphi 0, %s118
      %s121 = sphi 0, %s120
      %s135 = sphi 0, %s121
      %s139 = sphi 0, %s139
      %s141 = sphi 0, %s139
      %s142 = sphi 0, %s141
      %s156 = sphi 0, %s142
      %s160 = sphi 0, %s160
      %s162 = sphi 0, %s160
      %s163 = sphi 0, %s162
      %s177 = sphi 0, %s163
      %s183 = sphi 0, %s185
      %s186 = sphi 0, %s183
      %s187 = sphi 0, %s186
      %s203 = sphi 0, %s187
    $region4: #{tpu_custom_call.1} parent=1 // loop_header_branch
      %24 = sbr.rel (%p22) target = $region8
    $region5: #{tpu_custom_call.1} parent=1 // loop_body
      %s26 = ssub.s32 %s21, 1
      %s27 = ssub.s32 %s21, 2
      %s28 = sadd.s32 %s21, 1
      %s29 = ssub.s32 %s21, %s28
      %p30 = scmp.eq.s32.totalorder %s29, 0
      %s32 = sadd.s32 %s31, 1
      %s33 = scalar_select %p30, %s31, %s32
      %p36 = pneg %p30
      %p37 = scmp.eq.s32.totalorder %s21, 1
      %p38 = por %p36, %p37
      %p39 = scmp.ne.s32.totalorder %s31, %s34
      %p40 = scmp.eq.s32.totalorder %s21, 0
      %p41 = por %p39, %p40
      %p42 = scmp.ne.s32.totalorder %s31, %s34
      %p43 = scmp.eq.s32.totalorder %s26, 1
      %p44 = por %p42, %p43
      %p45 = scmp.ne.s32.totalorder %s34, %s35
      %p46 = scmp.eq.s32.totalorder %s26, 0
      %p47 = por %p45, %p46
      %p48 = scmp.ne.s32.totalorder %s34, %s35
      %p49 = scmp.eq.s32.totalorder %s27, 1
      %p50 = por %p48, %p49
      %p52 = scmp.ne.s32.totalorder %s35, %s51
      %p53 = scmp.eq.s32.totalorder %s27, 0
      %p54 = por %p52, %p53
      %s56 = sadd.s32 %s55, 1
      %p59 = scmp.eq.s32.totalorder %s21, 1
      %p60 = scmp.ne.s32.totalorder %s55, %s57
      %p61 = scmp.eq.s32.totalorder %s21, 0
      %p62 = por %p60, %p61
      %p63 = scmp.ne.s32.totalorder %s55, %s57
      %p64 = scmp.eq.s32.totalorder %s26, 1
      %p65 = por %p63, %p64
      %p66 = scmp.ne.s32.totalorder %s57, %s58
      %p67 = scmp.eq.s32.totalorder %s26, 0
      %p68 = por %p66, %p67
      %p69 = scmp.ne.s32.totalorder %s57, %s58
      %p70 = scmp.eq.s32.totalorder %s27, 1
      %p71 = por %p69, %p70
      %p73 = scmp.ne.s32.totalorder %s58, %s72
      %p74 = scmp.eq.s32.totalorder %s27, 0
      %p75 = por %p73, %p74
      %s77 = sadd.s32 %s76, 1
      %p80 = scmp.eq.s32.totalorder %s21, 1
      %p81 = scmp.ne.s32.totalorder %s76, %s78
      %p82 = scmp.eq.s32.totalorder %s21, 0
      %p83 = por %p81, %p82
      %p84 = scmp.ne.s32.totalorder %s76, %s78
      %p85 = scmp.eq.s32.totalorder %s26, 1
      %p86 = por %p84, %p85
      %p87 = scmp.ne.s32.totalorder %s78, %s79
      %p88 = scmp.eq.s32.totalorder %s26, 0
      %p89 = por %p87, %p88
      %p90 = scmp.ne.s32.totalorder %s78, %s79
      %p91 = scmp.eq.s32.totalorder %s27, 1
      %p92 = por %p90, %p91
      %p94 = scmp.ne.s32.totalorder %s79, %s93
      %p95 = scmp.eq.s32.totalorder %s27, 0
      %p96 = por %p94, %p95
      %s98 = sadd.s32 %s97, 1
      %p101 = scmp.eq.s32.totalorder %s21, 1
      %p102 = scmp.ne.s32.totalorder %s97, %s99
      %p103 = scmp.eq.s32.totalorder %s21, 0
      %p104 = por %p102, %p103
      %p105 = scmp.ne.s32.totalorder %s97, %s99
      %p106 = scmp.eq.s32.totalorder %s26, 1
      %p107 = por %p105, %p106
      %p108 = scmp.ne.s32.totalorder %s99, %s100
      %p109 = scmp.eq.s32.totalorder %s26, 0
      %p110 = por %p108, %p109
      %p111 = scmp.ne.s32.totalorder %s99, %s100
      %p112 = scmp.eq.s32.totalorder %s27, 1
      %p113 = por %p111, %p112
      %p115 = scmp.ne.s32.totalorder %s100, %s114
      %p116 = scmp.eq.s32.totalorder %s27, 0
      %p117 = por %p115, %p116
      %s119 = sadd.s32 %s118, 1
      %p122 = scmp.eq.s32.totalorder %s21, 1
      %p123 = scmp.ne.s32.totalorder %s118, %s120
      %p124 = scmp.eq.s32.totalorder %s21, 0
      %p125 = por %p123, %p124
      %p126 = scmp.ne.s32.totalorder %s118, %s120
      %p127 = scmp.eq.s32.totalorder %s26, 1
      %p128 = por %p126, %p127
      %p129 = scmp.ne.s32.totalorder %s120, %s121
      %p130 = scmp.eq.s32.totalorder %s26, 0
      %p131 = por %p129, %p130
      %p132 = scmp.ne.s32.totalorder %s120, %s121
      %p133 = scmp.eq.s32.totalorder %s27, 1
      %p134 = por %p132, %p133
      %p136 = scmp.ne.s32.totalorder %s121, %s135
      %p137 = scmp.eq.s32.totalorder %s27, 0
      %p138 = por %p136, %p137
      %s140 = sadd.s32 %s139, 1
      %p143 = scmp.eq.s32.totalorder %s21, 1
      %p144 = scmp.ne.s32.totalorder %s139, %s141
      %p145 = scmp.eq.s32.totalorder %s21, 0
      %p146 = por %p144, %p145
      %p147 = scmp.ne.s32.totalorder %s139, %s141
      %p148 = scmp.eq.s32.totalorder %s26, 1
      %p149 = por %p147, %p148
      %p150 = scmp.ne.s32.totalorder %s141, %s142
      %p151 = scmp.eq.s32.totalorder %s26, 0
      %p152 = por %p150, %p151
      %p153 = scmp.ne.s32.totalorder %s141, %s142
      %p154 = scmp.eq.s32.totalorder %s27, 1
      %p155 = por %p153, %p154
      %p157 = scmp.ne.s32.totalorder %s142, %s156
      %p158 = scmp.eq.s32.totalorder %s27, 0
      %p159 = por %p157, %p158
      %s161 = sadd.s32 %s160, 1
      %p164 = scmp.eq.s32.totalorder %s21, 1
      %p165 = scmp.ne.s32.totalorder %s160, %s162
      %p166 = scmp.eq.s32.totalorder %s21, 0
      %p167 = por %p165, %p166
      %p168 = scmp.ne.s32.totalorder %s160, %s162
      %p169 = scmp.eq.s32.totalorder %s26, 1
      %p170 = por %p168, %p169
      %p171 = scmp.ne.s32.totalorder %s162, %s163
      %p172 = scmp.eq.s32.totalorder %s26, 0
      %p173 = por %p171, %p172
      %p174 = scmp.ne.s32.totalorder %s162, %s163
      %p175 = scmp.eq.s32.totalorder %s27, 1
      %p176 = por %p174, %p175
      %p178 = scmp.ne.s32.totalorder %s163, %s177
      %p179 = scmp.eq.s32.totalorder %s27, 0
      %p180 = por %p178, %p179
      %s181 = ssub.s32 %s21, %s28
      %p182 = scmp.eq.s32.totalorder %s181, 0
      %s184 = sadd.s32 %s183, 1
      %s185 = scalar_select %p182, %s183, %s184
      %p188 = pneg %p182
      %p189 = scmp.eq.s32.totalorder %s21, 1
      %p190 = por %p188, %p189
      %p191 = scmp.ne.s32.totalorder %s183, %s186
      %p192 = scmp.eq.s32.totalorder %s21, 0
      %p193 = por %p191, %p192
      %p194 = scmp.ne.s32.totalorder %s183, %s186
      %p195 = scmp.eq.s32.totalorder %s26, 1
      %p196 = por %p194, %p195
      %p197 = scmp.ne.s32.totalorder %s186, %s187
      %p198 = scmp.eq.s32.totalorder %s26, 0
      %p199 = por %p197, %p198
      %p200 = scmp.ne.s32.totalorder %s186, %s187
      %p201 = scmp.eq.s32.totalorder %s27, 1
      %p202 = por %p200, %p201
      %p204 = scmp.ne.s32.totalorder %s187, %s203
      %p205 = scmp.eq.s32.totalorder %s27, 0
      %p206 = por %p204, %p205
      %p207 = scmp.le.s32.totalorder 1, %s21
      %p208 = scmp.lt.s32.totalorder %s21, 3
      %p209 = pnand %p207, %p208
      %p210 = pneg %p209
      // Predicated region
      $region9: #{tpu_custom_call.1} parent=5 // pred_check
        _
      $region10: #{tpu_custom_call.1} parent=5 // pred_check_branch
        %212 = sbr.rel (%p209) target = $region12
      $region11: #{tpu_custom_call.1} parent=5 // pred_region
        %s213 = ssub.s32 %s21, 1
        // Predicated region
        $region13: #{tpu_custom_call.1} parent=11 // pred_check
          %p214 = pneg %p68
        $region14: #{tpu_custom_call.1} parent=11 // pred_check_branch
          %216 = sbr.rel (%p214) target = $region16
        $region15: #{tpu_custom_call.1} parent=11 // pred_region
          %s218 = ssub.s32 18816, 18816
          %219 = vsyncadd [#allocation6], %s218
          %s220 = sshll.u32 [#allocation5], 4
          %s221 = int_to_ptr.vmem [resolvable:$true] %s220
          %226 = dma.hbm_to_vmem [thread:$0]  %s1, 18816, %s221, [#allocation6], 64, 64, 4
        $region16: #{tpu_custom_call.1} parent=11 // pred_fallthru
          _
        // Predicated region
        $region17: #{tpu_custom_call.1} parent=11 // pred_check
          %p227 = pneg %p89
        $region18: #{tpu_custom_call.1} parent=11 // pred_check_branch
          %229 = sbr.rel (%p227) target = $region20
        $region19: #{tpu_custom_call.1} parent=11 // pred_region
          _
        $region20: #{tpu_custom_call.1} parent=11 // pred_fallthru
          _
        // Predicated region
        $region21: #{tpu_custom_call.1} parent=11 // pred_check
          %p230 = pneg %p110
        $region22: #{tpu_custom_call.1} parent=11 // pred_check_branch
          %232 = sbr.rel (%p230) target = $region24
        $region23: #{tpu_custom_call.1} parent=11 // pred_region
          %s234 = ssub.s32 1024, 1024
          %235 = vsyncadd [#allocation6], %s234
          %s236 = sshll.u32 [#allocation7], 4
          %s237 = int_to_ptr.vmem [resolvable:$true] %s236
          %242 = dma.hbm_to_vmem [thread:$0]  %s3, 1024, %s237, [#allocation6], 64, 64, 4
        $region24: #{tpu_custom_call.1} parent=11 // pred_fallthru
          _
        // Predicated region
        $region25: #{tpu_custom_call.1} parent=11 // pred_check
          %p243 = pneg %p131
        $region26: #{tpu_custom_call.1} parent=11 // pred_check_branch
          %245 = sbr.rel (%p243) target = $region28
        $region27: #{tpu_custom_call.1} parent=11 // pred_region
          _
        $region28: #{tpu_custom_call.1} parent=11 // pred_fallthru
          _
        // Predicated region
        $region29: #{tpu_custom_call.1} parent=11 // pred_check
          %p246 = pneg %p152
        $region30: #{tpu_custom_call.1} parent=11 // pred_check_branch
          %248 = sbr.rel (%p246) target = $region32
        $region31: #{tpu_custom_call.1} parent=11 // pred_region
          %s250 = ssub.s32 1024, 1024
          %251 = vsyncadd [#allocation9], %s250
          %s252 = sshll.u32 [#allocation8], 4
          %s253 = int_to_ptr.vmem [resolvable:$true] %s252
          %258 = dma.hbm_to_vmem [thread:$0]  %s5, 1024, %s253, [#allocation9], 64, 64, 4
        $region32: #{tpu_custom_call.1} parent=11 // pred_fallthru
          _
        // Predicated region
        $region33: #{tpu_custom_call.1} parent=11 // pred_check
          %p259 = pneg %p173
        $region34: #{tpu_custom_call.1} parent=11 // pred_check_branch
          %261 = sbr.rel (%p259) target = $region36
        $region35: #{tpu_custom_call.1} parent=11 // pred_region
          _
        $region36: #{tpu_custom_call.1} parent=11 // pred_fallthru
          _
      $region12: #{tpu_custom_call.1} parent=5 // pred_fallthru
        _
      %p262 = scmp.lt.s32.totalorder %s21, 2
      // Predicated region
      $region37: #{tpu_custom_call.1} parent=5 // pred_check
        %p263 = pneg %p262
      $region38: #{tpu_custom_call.1} parent=5 // pred_check_branch
        %265 = sbr.rel (%p263) target = $region40
      $region39: #{tpu_custom_call.1} parent=5 // pred_region
        // Predicated region
        $region41: #{tpu_custom_call.1} parent=39 // pred_check
          %p266 = pneg %p41
        $region42: #{tpu_custom_call.1} parent=39 // pred_check_branch
          %268 = sbr.rel (%p266) target = $region44
        $region43: #{tpu_custom_call.1} parent=39 // pred_region
          %s269 = sand.u32 %s31, 1
          %s270 = scalar_lea.sflag [#allocation3], %s269
          %s271 = sand.u32 %s31, 1
          %s272 = smul.addr %s271, 608
          %s273 = scalar_lea.vmem [#allocation2], %s272
          %s274 = smul.u32 4, %s21
          %s276 = ssub.s32 9728, 9728
          %277 = vsyncadd %s270, %s276
          %s278 = smul.addr %s274, 19
          %s279 = smul.addr %s278, 128
          %s280 = scalar_lea.hbm %s0, %s279
          %s281 = sshll.u32 %s273, 4
          %s282 = int_to_ptr.vmem [resolvable:$true] %s281
          %287 = dma.hbm_to_vmem [thread:$0]  %s280, 9728, %s282, %s270, 2432, 2432, 152
        $region44: #{tpu_custom_call.1} parent=39 // pred_fallthru
          _
      $region40: #{tpu_custom_call.1} parent=5 // pred_fallthru
        _
      %p288 = scmp.le.s32.totalorder 1, %s21
      %p289 = scmp.lt.s32.totalorder %s21, 3
      %p290 = pnand %p288, %p289
      %p291 = pneg %p290
      // Predicated region
      $region45: #{tpu_custom_call.1} parent=5 // pred_check
        _
      $region46: #{tpu_custom_call.1} parent=5 // pred_check_branch
        %293 = sbr.rel (%p290) target = $region48
      $region47: #{tpu_custom_call.1} parent=5 // pred_region
        %s294 = ssub.s32 %s21, 1
        %s295 = sand.u32 %s34, 1
        %s296 = scalar_lea.sflag [#allocation3], %s295
        %s297 = sand.u32 %s34, 1
        %s298 = smul.addr %s297, 608
        %s299 = scalar_lea.vmem [#allocation2], %s298
        // Predicated region
        $region49: #{tpu_custom_call.1} parent=47 // pred_check
          %p300 = pneg %p47
        $region50: #{tpu_custom_call.1} parent=47 // pred_check_branch
          %302 = sbr.rel (%p300) target = $region52
        $region51: #{tpu_custom_call.1} parent=47 // pred_region
          %303 = dma.done %s296, 9728
        $region52: #{tpu_custom_call.1} parent=47 // pred_fallthru
          _
        // Predicated region
        $region53: #{tpu_custom_call.1} parent=47 // pred_check
          %p304 = pneg %p68
        $region54: #{tpu_custom_call.1} parent=47 // pred_check_branch
          %306 = sbr.rel (%p304) target = $region56
        $region55: #{tpu_custom_call.1} parent=47 // pred_region
          %307 = dma.done [#allocation6], 18816
        $region56: #{tpu_custom_call.1} parent=47 // pred_fallthru
          _
        // Predicated region
        $region57: #{tpu_custom_call.1} parent=47 // pred_check
          %p308 = pneg %p110
        $region58: #{tpu_custom_call.1} parent=47 // pred_check_branch
          %310 = sbr.rel (%p308) target = $region60
        $region59: #{tpu_custom_call.1} parent=47 // pred_region
          %311 = dma.done [#allocation6], 1024
        $region60: #{tpu_custom_call.1} parent=47 // pred_fallthru
          _
        // Predicated region
        $region61: #{tpu_custom_call.1} parent=47 // pred_check
          %p312 = pneg %p152
        $region62: #{tpu_custom_call.1} parent=47 // pred_check_branch
          %314 = sbr.rel (%p312) target = $region64
        $region63: #{tpu_custom_call.1} parent=47 // pred_region
          %315 = dma.done [#allocation9], 1024
        $region64: #{tpu_custom_call.1} parent=47 // pred_fallthru
          _
        %s316 = sand.u32 %s34, 1
        %s317 = scalar_lea.sflag [#allocation3], %s316
        %s318 = sand.u32 %s34, 1
        %s319 = smul.addr %s318, 608
        %s320 = scalar_lea.vmem [#allocation2], %s319
        %p321 = pneg %p47
        %p322 = pneg %p44
        %p323 = pneg %p68
        %p324 = pneg %p65
        %p325 = pneg %p89
        %p326 = pneg %p86
        %p327 = pneg %p110
        %p328 = pneg %p107
        %p329 = pneg %p131
        %p330 = pneg %p128
        %p331 = pneg %p152
        %p332 = pneg %p149
        %p333 = pneg %p173
        %p334 = pneg %p170
        %p335 = pneg %p199
        %p336 = pneg %p196
        %s337 = sand.u32 %s186, 1
        %s338 = scalar_lea.sflag [#allocation4], %s337
        %s339 = sand.u32 %s186, 1
        %s340 = smul.addr %s339, 32
        %s341 = scalar_lea.vmem [#allocation10], %s340
        %s342 = smul.u32 4, %s26
        %s343 = smul.u32 4, %s26
        %v345 = vld [vmem:[%s299] sm:$0xff]
        %v346 = vld [vmem:[%s299 + $0x8] sm:$0xff]
        %v347 = vld [vmem:[%s299 + $0x10] sm:$0xff]
        %v348 = vld [vmem:[%s299 + $0x18] sm:$0xff]
        %v349 = vld [vmem:[%s299 + $0x20] sm:$0xff]
        %v350 = vld [vmem:[%s299 + $0x28] sm:$0xff]
        %v351 = vld [vmem:[%s299 + $0x30] sm:$0xff]
        %v352 = vld [vmem:[%s299 + $0x38] sm:$0xff]
        %v353 = vld [vmem:[%s299 + $0x40] sm:$0xff]
        %v354 = vld [vmem:[%s299 + $0x48] sm:$0xff]
        %v355 = vld [vmem:[%s299 + $0x50] sm:$0xff]
        %v356 = vld [vmem:[%s299 + $0x58] sm:$0xff]
        %v357 = vld [vmem:[%s299 + $0x60] sm:$0xff]
        %v358 = vld [vmem:[%s299 + $0x68] sm:$0xff]
        %v359 = vld [vmem:[%s299 + $0x70] sm:$0xff]
        %v360 = vld [vmem:[%s299 + $0x78] sm:$0xff]
        %v361 = vld [vmem:[%s299 + $0x80] sm:$0xff]
        %v362 = vld [vmem:[%s299 + $0x88] sm:$0xff]
        %v363 = vld [vmem:[%s299 + $0x90] sm:$0xff]
        %v364 = vld [vmem:[%s299 + $0x98] sm:$0xff]
        %v365 = vld [vmem:[%s299 + $0xa0] sm:$0xff]
        %v366 = vld [vmem:[%s299 + $0xa8] sm:$0xff]
        %v367 = vld [vmem:[%s299 + $0xb0] sm:$0xff]
        %v368 = vld [vmem:[%s299 + $0xb8] sm:$0xff]
        %v369 = vld [vmem:[%s299 + $0xc0] sm:$0xff]
        %v370 = vld [vmem:[%s299 + $0xc8] sm:$0xff]
        %v371 = vld [vmem:[%s299 + $0xd0] sm:$0xff]
        %v372 = vld [vmem:[%s299 + $0xd8] sm:$0xff]
        %v373 = vld [vmem:[%s299 + $0xe0] sm:$0xff]
        %v374 = vld [vmem:[%s299 + $0xe8] sm:$0xff]
        %v375 = vld [vmem:[%s299 + $0xf0] sm:$0xff]
        %v376 = vld [vmem:[%s299 + $0xf8] sm:$0xff]
        %v377 = vld [vmem:[%s299 + $0x100] sm:$0xff]
        %v378 = vld [vmem:[%s299 + $0x108] sm:$0xff]
        %v379 = vld [vmem:[%s299 + $0x110] sm:$0xff]
        %v380 = vld [vmem:[%s299 + $0x118] sm:$0xff]
        %v381 = vld [vmem:[%s299 + $0x120] sm:$0xff]
        %v382 = vld [vmem:[%s299 + $0x128] sm:$0xff]
        %v383 = vld [vmem:[%s299 + $0x130] sm:$0xff]
        %v384 = vld [vmem:[%s299 + $0x138] sm:$0xff]
        %v385 = vld [vmem:[%s299 + $0x140] sm:$0xff]
        %v386 = vld [vmem:[%s299 + $0x148] sm:$0xff]
        %v387 = vld [vmem:[%s299 + $0x150] sm:$0xff]
        %v388 = vld [vmem:[%s299 + $0x158] sm:$0xff]
        %v389 = vld [vmem:[%s299 + $0x160] sm:$0xff]
        %v390 = vld [vmem:[%s299 + $0x168] sm:$0xff]
        %v391 = vld [vmem:[%s299 + $0x170] sm:$0xff]
        %v392 = vld [vmem:[%s299 + $0x178] sm:$0xff]
        %v393 = vld [vmem:[%s299 + $0x180] sm:$0xff]
        %v394 = vld [vmem:[%s299 + $0x188] sm:$0xff]
        %v395 = vld [vmem:[%s299 + $0x190] sm:$0xff]
        %v396 = vld [vmem:[%s299 + $0x198] sm:$0xff]
        %v397 = vld [vmem:[%s299 + $0x1a0] sm:$0xff]
        %v398 = vld [vmem:[%s299 + $0x1a8] sm:$0xff]
        %v399 = vld [vmem:[%s299 + $0x1b0] sm:$0xff]
        %v400 = vld [vmem:[%s299 + $0x1b8] sm:$0xff]
        %v401 = vld [vmem:[%s299 + $0x1c0] sm:$0xff]
        %v402 = vld [vmem:[%s299 + $0x1c8] sm:$0xff]
        %v403 = vld [vmem:[%s299 + $0x1d0] sm:$0xff]
        %v404 = vld [vmem:[%s299 + $0x1d8] sm:$0xff]
        %v405 = vld [vmem:[%s299 + $0x1e0] sm:$0xff]
        %v406 = vld [vmem:[%s299 + $0x1e8] sm:$0xff]
        %v407 = vld [vmem:[%s299 + $0x1f0] sm:$0xff]
        %v408 = vld [vmem:[%s299 + $0x1f8] sm:$0xff]
        %v409 = vld [vmem:[%s299 + $0x200] sm:$0xff]
        %v410 = vld [vmem:[%s299 + $0x208] sm:$0xff]
        %v411 = vld [vmem:[%s299 + $0x210] sm:$0xff]
        %v412 = vld [vmem:[%s299 + $0x218] sm:$0xff]
        %v413 = vld [vmem:[%s299 + $0x220] sm:$0xff]
        %v414 = vld [vmem:[%s299 + $0x228] sm:$0xff]
        %v415 = vld [vmem:[%s299 + $0x230] sm:$0xff]
        %v416 = vld [vmem:[%s299 + $0x238] sm:$0xff]
        %v417 = vld [vmem:[%s299 + $0x240] sm:$0xff]
        %v418 = vld [vmem:[%s299 + $0x248] sm:$0xff]
        %v419 = vld [vmem:[%s299 + $0x250] sm:$0xff]
        %v420 = vld [vmem:[%s299 + $0x258] sm:$0xff]
        %v421 = vpack.c.bf16 %v364, %v345
        %v422 = vpack.c.bf16 %v365, %v346
        %v423 = vpack.c.bf16 %v366, %v347
        %v424 = vpack.c.bf16 %v367, %v348
        %v425 = vpack.c.bf16 %v368, %v349
        %v426 = vpack.c.bf16 %v369, %v350
        %v427 = vpack.c.bf16 %v370, %v351
        %v428 = vpack.c.bf16 %v371, %v352
        %v429 = vpack.c.bf16 %v372, %v353
        %v430 = vpack.c.bf16 %v373, %v354
        %v431 = vpack.c.bf16 %v374, %v355
        %v432 = vpack.c.bf16 %v375, %v356
        %v433 = vpack.c.bf16 %v376, %v357
        %v434 = vpack.c.bf16 %v377, %v358
        %v435 = vpack.c.bf16 %v378, %v359
        %v436 = vpack.c.bf16 %v379, %v360
        %v437 = vpack.c.bf16 %v380, %v361
        %v438 = vpack.c.bf16 %v381, %v362
        %v439 = vpack.c.bf16 %v382, %v363
        %v440 = vpack.c.bf16 %v402, %v383
        %v441 = vpack.c.bf16 %v403, %v384
        %v442 = vpack.c.bf16 %v404, %v385
        %v443 = vpack.c.bf16 %v405, %v386
        %v444 = vpack.c.bf16 %v406, %v387
        %v445 = vpack.c.bf16 %v407, %v388
        %v446 = vpack.c.bf16 %v408, %v389
        %v447 = vpack.c.bf16 %v409, %v390
        %v448 = vpack.c.bf16 %v410, %v391
        %v449 = vpack.c.bf16 %v411, %v392
        %v450 = vpack.c.bf16 %v412, %v393
        %v451 = vpack.c.bf16 %v413, %v394
        %v452 = vpack.c.bf16 %v414, %v395
        %v453 = vpack.c.bf16 %v415, %v396
        %v454 = vpack.c.bf16 %v416, %v397
        %v455 = vpack.c.bf16 %v417, %v398
        %v456 = vpack.c.bf16 %v418, %v399
        %v457 = vpack.c.bf16 %v419, %v400
        %v458 = vpack.c.bf16 %v420, %v401
        %v459 = vld [vmem:[#allocation5] sm:$0xf]
        %v460 = vld [vmem:[#allocation5 + $0x4] sm:$0xf]
        %v461 = vld [vmem:[#allocation5 + $0x8] sm:$0xf]
        %v462 = vld [vmem:[#allocation5 + $0xc] sm:$0xf]
        %v463 = vld [vmem:[#allocation5 + $0x10] sm:$0xf]
        %v464 = vld [vmem:[#allocation5 + $0x14] sm:$0xf]
        %v465 = vld [vmem:[#allocation5 + $0x18] sm:$0xf]
        %v466 = vld [vmem:[#allocation5 + $0x1c] sm:$0xf]
        %v467 = vld [vmem:[#allocation5 + $0x20] sm:$0xf]
        %v468 = vld [vmem:[#allocation5 + $0x24] sm:$0xf]
        %v469 = vld [vmem:[#allocation5 + $0x28] sm:$0xf]
        %v470 = vld [vmem:[#allocation5 + $0x2c] sm:$0xf]
        %v471 = vld [vmem:[#allocation5 + $0x30] sm:$0xf]
        %v472 = vld [vmem:[#allocation5 + $0x34] sm:$0xf]
        %v473 = vld [vmem:[#allocation5 + $0x38] sm:$0xf]
        %v474 = vld [vmem:[#allocation5 + $0x3c] sm:$0xf]
        %v475 = vld [vmem:[#allocation5 + $0x40] sm:$0xf]
        %v476 = vld [vmem:[#allocation5 + $0x44] sm:$0xf]
        %v477 = vld [vmem:[#allocation5 + $0x48] sm:$0xf]
        %v478 = vld [vmem:[#allocation5 + $0x4c] sm:$0xf]
        %v479 = vld [vmem:[#allocation5 + $0x50] sm:$0xf]
        %v480 = vld [vmem:[#allocation5 + $0x54] sm:$0xf]
        %v481 = vld [vmem:[#allocation5 + $0x58] sm:$0xf]
        %v482 = vld [vmem:[#allocation5 + $0x5c] sm:$0xf]
        %v483 = vld [vmem:[#allocation5 + $0x60] sm:$0xf]
        %v484 = vld [vmem:[#allocation5 + $0x64] sm:$0xf]
        %v485 = vld [vmem:[#allocation5 + $0x68] sm:$0xf]
        %v486 = vld [vmem:[#allocation5 + $0x6c] sm:$0xf]
        %v487 = vld [vmem:[#allocation5 + $0x70] sm:$0xf]
        %v488 = vld [vmem:[#allocation5 + $0x74] sm:$0xf]
        %v489 = vld [vmem:[#allocation5 + $0x78] sm:$0xf]
        %v490 = vld [vmem:[#allocation5 + $0x7c] sm:$0xf]
        %v491 = vld [vmem:[#allocation5 + $0x80] sm:$0xf]
        %v492 = vld [vmem:[#allocation5 + $0x84] sm:$0xf]
        %v493 = vld [vmem:[#allocation5 + $0x88] sm:$0xf]
        %v494 = vld [vmem:[#allocation5 + $0x8c] sm:$0xf]
        %v495 = vld [vmem:[#allocation5 + $0x90] sm:$0xf]
        %v496 = vld [vmem:[#allocation5 + $0x94] sm:$0xf]
        %v497 = vld [vmem:[#allocation5 + $0x98] sm:$0xf]
        %v498 = vld [vmem:[#allocation5 + $0x9c] sm:$0xf]
        %v499 = vld [vmem:[#allocation5 + $0xa0] sm:$0xf]
        %v500 = vld [vmem:[#allocation5 + $0xa4] sm:$0xf]
        %v501 = vld [vmem:[#allocation5 + $0xa8] sm:$0xf]
        %v502 = vld [vmem:[#allocation5 + $0xac] sm:$0xf]
        %v503 = vld [vmem:[#allocation5 + $0xb0] sm:$0xf]
        %v504 = vld [vmem:[#allocation5 + $0xb4] sm:$0xf]
        %v505 = vld [vmem:[#allocation5 + $0xb8] sm:$0xf]
        %v506 = vld [vmem:[#allocation5 + $0xbc] sm:$0xf]
        %v507 = vld [vmem:[#allocation5 + $0xc0] sm:$0xf]
        %v508 = vld [vmem:[#allocation5 + $0xc4] sm:$0xf]
        %v509 = vld [vmem:[#allocation5 + $0xc8] sm:$0xf]
        %v510 = vld [vmem:[#allocation5 + $0xcc] sm:$0xf]
        %v511 = vld [vmem:[#allocation5 + $0xd0] sm:$0xf]
        %v512 = vld [vmem:[#allocation5 + $0xd4] sm:$0xf]
        %v513 = vld [vmem:[#allocation5 + $0xd8] sm:$0xf]
        %v514 = vld [vmem:[#allocation5 + $0xdc] sm:$0xf]
        %v515 = vld [vmem:[#allocation5 + $0xe0] sm:$0xf]
        %v516 = vld [vmem:[#allocation5 + $0xe4] sm:$0xf]
        %v517 = vld [vmem:[#allocation5 + $0xe8] sm:$0xf]
        %v518 = vld [vmem:[#allocation5 + $0xec] sm:$0xf]
        %v519 = vld [vmem:[#allocation5 + $0xf0] sm:$0xf]
        %v520 = vld [vmem:[#allocation5 + $0xf4] sm:$0xf]
        %v521 = vld [vmem:[#allocation5 + $0xf8] sm:$0xf]
        %v522 = vld [vmem:[#allocation5 + $0xfc] sm:$0xf]
        %v523 = vld [vmem:[#allocation5 + $0x100] sm:$0xf]
        %v524 = vld [vmem:[#allocation5 + $0x104] sm:$0xf]
        %v525 = vld [vmem:[#allocation5 + $0x108] sm:$0xf]
        %v526 = vld [vmem:[#allocation5 + $0x10c] sm:$0xf]
        %v527 = vld [vmem:[#allocation5 + $0x110] sm:$0xf]
        %v528 = vld [vmem:[#allocation5 + $0x114] sm:$0xf]
        %v529 = vld [vmem:[#allocation5 + $0x118] sm:$0xf]
        %v530 = vld [vmem:[#allocation5 + $0x11c] sm:$0xf]
        %v531 = vld [vmem:[#allocation5 + $0x120] sm:$0xf]
        %v532 = vld [vmem:[#allocation5 + $0x124] sm:$0xf]
        %v533 = vld [vmem:[#allocation5 + $0x128] sm:$0xf]
        %v534 = vld [vmem:[#allocation5 + $0x12c] sm:$0xf]
        %v535 = vld [vmem:[#allocation5 + $0x130] sm:$0xf]
        %v536 = vld [vmem:[#allocation5 + $0x134] sm:$0xf]
        %v537 = vld [vmem:[#allocation5 + $0x138] sm:$0xf]
        %v538 = vld [vmem:[#allocation5 + $0x13c] sm:$0xf]
        %v539 = vld [vmem:[#allocation5 + $0x140] sm:$0xf]
        %v540 = vld [vmem:[#allocation5 + $0x144] sm:$0xf]
        %v541 = vld [vmem:[#allocation5 + $0x148] sm:$0xf]
        %v542 = vld [vmem:[#allocation5 + $0x14c] sm:$0xf]
        %v543 = vld [vmem:[#allocation5 + $0x150] sm:$0xf]
        %v544 = vld [vmem:[#allocation5 + $0x154] sm:$0xf]
        %v545 = vld [vmem:[#allocation5 + $0x158] sm:$0xf]
        %v546 = vld [vmem:[#allocation5 + $0x15c] sm:$0xf]
        %v547 = vld [vmem:[#allocation5 + $0x160] sm:$0xf]
        %v548 = vld [vmem:[#allocation5 + $0x164] sm:$0xf]
        %v549 = vld [vmem:[#allocation5 + $0x168] sm:$0xf]
        %v550 = vld [vmem:[#allocation5 + $0x16c] sm:$0xf]
        %v551 = vld [vmem:[#allocation5 + $0x170] sm:$0xf]
        %v552 = vld [vmem:[#allocation5 + $0x174] sm:$0xf]
        %v553 = vld [vmem:[#allocation5 + $0x178] sm:$0xf]
        %v554 = vld [vmem:[#allocation5 + $0x17c] sm:$0xf]
        %v555 = vld [vmem:[#allocation5 + $0x180] sm:$0xf]
        %v556 = vld [vmem:[#allocation5 + $0x184] sm:$0xf]
        %v557 = vld [vmem:[#allocation5 + $0x188] sm:$0xf]
        %v558 = vld [vmem:[#allocation5 + $0x18c] sm:$0xf]
        %v559 = vld [vmem:[#allocation5 + $0x190] sm:$0xf]
        %v560 = vld [vmem:[#allocation5 + $0x194] sm:$0xf]
        %v561 = vld [vmem:[#allocation5 + $0x198] sm:$0xf]
        %v562 = vld [vmem:[#allocation5 + $0x19c] sm:$0xf]
        %v563 = vld [vmem:[#allocation5 + $0x1a0] sm:$0xf]
        %v564 = vld [vmem:[#allocation5 + $0x1a4] sm:$0xf]
        %v565 = vld [vmem:[#allocation5 + $0x1a8] sm:$0xf]
        %v566 = vld [vmem:[#allocation5 + $0x1ac] sm:$0xf]
        %v567 = vld [vmem:[#allocation5 + $0x1b0] sm:$0xf]
        %v568 = vld [vmem:[#allocation5 + $0x1b4] sm:$0xf]
        %v569 = vld [vmem:[#allocation5 + $0x1b8] sm:$0xf]
        %v570 = vld [vmem:[#allocation5 + $0x1bc] sm:$0xf]
        %v571 = vld [vmem:[#allocation5 + $0x1c0] sm:$0xf]
        %v572 = vld [vmem:[#allocation5 + $0x1c4] sm:$0xf]
        %v573 = vld [vmem:[#allocation5 + $0x1c8] sm:$0xf]
        %v574 = vld [vmem:[#allocation5 + $0x1cc] sm:$0xf]
        %v575 = vld [vmem:[#allocation5 + $0x1d0] sm:$0xf]
        %v576 = vld [vmem:[#allocation5 + $0x1d4] sm:$0xf]
        %v577 = vld [vmem:[#allocation5 + $0x1d8] sm:$0xf]
        %v578 = vld [vmem:[#allocation5 + $0x1dc] sm:$0xf]
        %v579 = vld [vmem:[#allocation5 + $0x1e0] sm:$0xf]
        %v580 = vld [vmem:[#allocation5 + $0x1e4] sm:$0xf]
        %v581 = vld [vmem:[#allocation5 + $0x1e8] sm:$0xf]
        %v582 = vld [vmem:[#allocation5 + $0x1ec] sm:$0xf]
        %v583 = vld [vmem:[#allocation5 + $0x1f0] sm:$0xf]
        %v584 = vld [vmem:[#allocation5 + $0x1f4] sm:$0xf]
        %v585 = vld [vmem:[#allocation5 + $0x1f8] sm:$0xf]
        %v586 = vld [vmem:[#allocation5 + $0x1fc] sm:$0xf]
        %v587 = vld [vmem:[#allocation5 + $0x200] sm:$0xf]
        %v588 = vld [vmem:[#allocation5 + $0x204] sm:$0xf]
        %v589 = vld [vmem:[#allocation5 + $0x208] sm:$0xf]
        %v590 = vld [vmem:[#allocation5 + $0x20c] sm:$0xf]
        %v591 = vld [vmem:[#allocation5 + $0x210] sm:$0xf]
        %v592 = vld [vmem:[#allocation5 + $0x214] sm:$0xf]
        %v593 = vld [vmem:[#allocation5 + $0x218] sm:$0xf]
        %v594 = vld [vmem:[#allocation5 + $0x21c] sm:$0xf]
        %v595 = vld [vmem:[#allocation5 + $0x220] sm:$0xf]
        %v596 = vld [vmem:[#allocation5 + $0x224] sm:$0xf]
        %v597 = vld [vmem:[#allocation5 + $0x228] sm:$0xf]
        %v598 = vld [vmem:[#allocation5 + $0x22c] sm:$0xf]
        %v599 = vld [vmem:[#allocation5 + $0x230] sm:$0xf]
        %v600 = vld [vmem:[#allocation5 + $0x234] sm:$0xf]
        %v601 = vld [vmem:[#allocation5 + $0x238] sm:$0xf]
        %v602 = vld [vmem:[#allocation5 + $0x23c] sm:$0xf]
        %v603 = vld [vmem:[#allocation5 + $0x240] sm:$0xf]
        %v604 = vld [vmem:[#allocation5 + $0x244] sm:$0xf]
        %v605 = vld [vmem:[#allocation5 + $0x248] sm:$0xf]
        %v606 = vld [vmem:[#allocation5 + $0x24c] sm:$0xf]
        %v607 = vld [vmem:[#allocation5 + $0x250] sm:$0xf]
        %v608 = vld [vmem:[#allocation5 + $0x254] sm:$0xf]
        %v609 = vld [vmem:[#allocation5 + $0x258] sm:$0xf]
        %v610 = vld [vmem:[#allocation5 + $0x25c] sm:$0xf]
        %v611 = vld [vmem:[#allocation5 + $0x260] sm:$0xf]
        %v612 = vld [vmem:[#allocation5 + $0x264] sm:$0xf]
        %v613 = vld [vmem:[#allocation5 + $0x268] sm:$0xf]
        %v614 = vld [vmem:[#allocation5 + $0x26c] sm:$0xf]
        %v615 = vld [vmem:[#allocation5 + $0x270] sm:$0xf]
        %v616 = vld [vmem:[#allocation5 + $0x274] sm:$0xf]
        %v617 = vld [vmem:[#allocation5 + $0x278] sm:$0xf]
        %v618 = vld [vmem:[#allocation5 + $0x27c] sm:$0xf]
        %v619 = vld [vmem:[#allocation5 + $0x280] sm:$0xf]
        %v620 = vld [vmem:[#allocation5 + $0x284] sm:$0xf]
        %v621 = vld [vmem:[#allocation5 + $0x288] sm:$0xf]
        %v622 = vld [vmem:[#allocation5 + $0x28c] sm:$0xf]
        %v623 = vld [vmem:[#allocation5 + $0x290] sm:$0xf]
        %v624 = vld [vmem:[#allocation5 + $0x294] sm:$0xf]
        %v625 = vld [vmem:[#allocation5 + $0x298] sm:$0xf]
        %v626 = vld [vmem:[#allocation5 + $0x29c] sm:$0xf]
        %v627 = vld [vmem:[#allocation5 + $0x2a0] sm:$0xf]
        %v628 = vld [vmem:[#allocation5 + $0x2a4] sm:$0xf]
        %v629 = vld [vmem:[#allocation5 + $0x2a8] sm:$0xf]
        %v630 = vld [vmem:[#allocation5 + $0x2ac] sm:$0xf]
        %v631 = vld [vmem:[#allocation5 + $0x2b0] sm:$0xf]
        %v632 = vld [vmem:[#allocation5 + $0x2b4] sm:$0xf]
        %v633 = vld [vmem:[#allocation5 + $0x2b8] sm:$0xf]
        %v634 = vld [vmem:[#allocation5 + $0x2bc] sm:$0xf]
        %v635 = vld [vmem:[#allocation5 + $0x2c0] sm:$0xf]
        %v636 = vld [vmem:[#allocation5 + $0x2c4] sm:$0xf]
        %v637 = vld [vmem:[#allocation5 + $0x2c8] sm:$0xf]
        %v638 = vld [vmem:[#allocation5 + $0x2cc] sm:$0xf]
        %v639 = vld [vmem:[#allocation5 + $0x2d0] sm:$0xf]
        %v640 = vld [vmem:[#allocation5 + $0x2d4] sm:$0xf]
        %v641 = vld [vmem:[#allocation5 + $0x2d8] sm:$0xf]
        %v642 = vld [vmem:[#allocation5 + $0x2dc] sm:$0xf]
        %v643 = vld [vmem:[#allocation5 + $0x2e0] sm:$0xf]
        %v644 = vld [vmem:[#allocation5 + $0x2e4] sm:$0xf]
        %v645 = vld [vmem:[#allocation5 + $0x2e8] sm:$0xf]
        %v646 = vld [vmem:[#allocation5 + $0x2ec] sm:$0xf]
        %v647 = vld [vmem:[#allocation5 + $0x2f0] sm:$0xf]
        %v648 = vld [vmem:[#allocation5 + $0x2f4] sm:$0xf]
        %v649 = vld [vmem:[#allocation5 + $0x2f8] sm:$0xf]
        %v650 = vld [vmem:[#allocation5 + $0x2fc] sm:$0xf]
        %v651 = vld [vmem:[#allocation5 + $0x300] sm:$0xf]
        %v652 = vld [vmem:[#allocation5 + $0x304] sm:$0xf]
        %v653 = vld [vmem:[#allocation5 + $0x308] sm:$0xf]
        %v654 = vld [vmem:[#allocation5 + $0x30c] sm:$0xf]
        %v655 = vld [vmem:[#allocation5 + $0x310] sm:$0xf]
        %v656 = vld [vmem:[#allocation5 + $0x314] sm:$0xf]
        %v657 = vld [vmem:[#allocation5 + $0x318] sm:$0xf]
        %v658 = vld [vmem:[#allocation5 + $0x31c] sm:$0xf]
        %v659 = vld [vmem:[#allocation5 + $0x320] sm:$0xf]
        %v660 = vld [vmem:[#allocation5 + $0x324] sm:$0xf]
        %v661 = vld [vmem:[#allocation5 + $0x328] sm:$0xf]
        %v662 = vld [vmem:[#allocation5 + $0x32c] sm:$0xf]
        %v663 = vld [vmem:[#allocation5 + $0x330] sm:$0xf]
        %v664 = vld [vmem:[#allocation5 + $0x334] sm:$0xf]
        %v665 = vld [vmem:[#allocation5 + $0x338] sm:$0xf]
        %v666 = vld [vmem:[#allocation5 + $0x33c] sm:$0xf]
        %v667 = vld [vmem:[#allocation5 + $0x340] sm:$0xf]
        %v668 = vld [vmem:[#allocation5 + $0x344] sm:$0xf]
        %v669 = vld [vmem:[#allocation5 + $0x348] sm:$0xf]
        %v670 = vld [vmem:[#allocation5 + $0x34c] sm:$0xf]
        %v671 = vld [vmem:[#allocation5 + $0x350] sm:$0xf]
        %v672 = vld [vmem:[#allocation5 + $0x354] sm:$0xf]
        %v673 = vld [vmem:[#allocation5 + $0x358] sm:$0xf]
        %v674 = vld [vmem:[#allocation5 + $0x35c] sm:$0xf]
        %v675 = vld [vmem:[#allocation5 + $0x360] sm:$0xf]
        %v676 = vld [vmem:[#allocation5 + $0x364] sm:$0xf]
        %v677 = vld [vmem:[#allocation5 + $0x368] sm:$0xf]
        %v678 = vld [vmem:[#allocation5 + $0x36c] sm:$0xf]
        %v679 = vld [vmem:[#allocation5 + $0x370] sm:$0xf]
        %v680 = vld [vmem:[#allocation5 + $0x374] sm:$0xf]
        %v681 = vld [vmem:[#allocation5 + $0x378] sm:$0xf]
        %v682 = vld [vmem:[#allocation5 + $0x37c] sm:$0xf]
        %v683 = vld [vmem:[#allocation5 + $0x380] sm:$0xf]
        %v684 = vld [vmem:[#allocation5 + $0x384] sm:$0xf]
        %v685 = vld [vmem:[#allocation5 + $0x388] sm:$0xf]
        %v686 = vld [vmem:[#allocation5 + $0x38c] sm:$0xf]
        %v687 = vld [vmem:[#allocation5 + $0x390] sm:$0xf]
        %v688 = vld [vmem:[#allocation5 + $0x394] sm:$0xf]
        %v689 = vld [vmem:[#allocation5 + $0x398] sm:$0xf]
        %v690 = vld [vmem:[#allocation5 + $0x39c] sm:$0xf]
        %v691 = vld [vmem:[#allocation5 + $0x3a0] sm:$0xf]
        %v692 = vld [vmem:[#allocation5 + $0x3a4] sm:$0xf]
        %v693 = vld [vmem:[#allocation5 + $0x3a8] sm:$0xf]
        %v694 = vld [vmem:[#allocation5 + $0x3ac] sm:$0xf]
        %v695 = vld [vmem:[#allocation5 + $0x3b0] sm:$0xf]
        %v696 = vld [vmem:[#allocation5 + $0x3b4] sm:$0xf]
        %v697 = vld [vmem:[#allocation5 + $0x3b8] sm:$0xf]
        %v698 = vld [vmem:[#allocation5 + $0x3bc] sm:$0xf]
        %v699 = vld [vmem:[#allocation5 + $0x3c0] sm:$0xf]
        %v700 = vld [vmem:[#allocation5 + $0x3c4] sm:$0xf]
        %v701 = vld [vmem:[#allocation5 + $0x3c8] sm:$0xf]
        %v702 = vld [vmem:[#allocation5 + $0x3cc] sm:$0xf]
        %v703 = vld [vmem:[#allocation5 + $0x3d0] sm:$0xf]
        %v704 = vld [vmem:[#allocation5 + $0x3d4] sm:$0xf]
        %v705 = vld [vmem:[#allocation5 + $0x3d8] sm:$0xf]
        %v706 = vld [vmem:[#allocation5 + $0x3dc] sm:$0xf]
        %v707 = vld [vmem:[#allocation5 + $0x3e0] sm:$0xf]
        %v708 = vld [vmem:[#allocation5 + $0x3e4] sm:$0xf]
        %v709 = vld [vmem:[#allocation5 + $0x3e8] sm:$0xf]
        %v710 = vld [vmem:[#allocation5 + $0x3ec] sm:$0xf]
        %v711 = vld [vmem:[#allocation5 + $0x3f0] sm:$0xf]
        %v712 = vld [vmem:[#allocation5 + $0x3f4] sm:$0xf]
        %v713 = vld [vmem:[#allocation5 + $0x3f8] sm:$0xf]
        %v714 = vld [vmem:[#allocation5 + $0x3fc] sm:$0xf]
        %v715 = vld [vmem:[#allocation5 + $0x400] sm:$0xf]
        %v716 = vld [vmem:[#allocation5 + $0x404] sm:$0xf]
        %v717 = vld [vmem:[#allocation5 + $0x408] sm:$0xf]
        %v718 = vld [vmem:[#allocation5 + $0x40c] sm:$0xf]
        %v719 = vld [vmem:[#allocation5 + $0x410] sm:$0xf]
        %v720 = vld [vmem:[#allocation5 + $0x414] sm:$0xf]
        %v721 = vld [vmem:[#allocation5 + $0x418] sm:$0xf]
        %v722 = vld [vmem:[#allocation5 + $0x41c] sm:$0xf]
        %v723 = vld [vmem:[#allocation5 + $0x420] sm:$0xf]
        %v724 = vld [vmem:[#allocation5 + $0x424] sm:$0xf]
        %v725 = vld [vmem:[#allocation5 + $0x428] sm:$0xf]
        %v726 = vld [vmem:[#allocation5 + $0x42c] sm:$0xf]
        %v727 = vld [vmem:[#allocation5 + $0x430] sm:$0xf]
        %v728 = vld [vmem:[#allocation5 + $0x434] sm:$0xf]
        %v729 = vld [vmem:[#allocation5 + $0x438] sm:$0xf]
        %v730 = vld [vmem:[#allocation5 + $0x43c] sm:$0xf]
        %v731 = vld [vmem:[#allocation5 + $0x440] sm:$0xf]
        %v732 = vld [vmem:[#allocation5 + $0x444] sm:$0xf]
        %v733 = vld [vmem:[#allocation5 + $0x448] sm:$0xf]
        %v734 = vld [vmem:[#allocation5 + $0x44c] sm:$0xf]
        %v735 = vld [vmem:[#allocation5 + $0x450] sm:$0xf]
        %v736 = vld [vmem:[#allocation5 + $0x454] sm:$0xf]
        %v737 = vld [vmem:[#allocation5 + $0x458] sm:$0xf]
        %v738 = vld [vmem:[#allocation5 + $0x45c] sm:$0xf]
        %v739 = vld [vmem:[#allocation5 + $0x460] sm:$0xf]
        %v740 = vld [vmem:[#allocation5 + $0x464] sm:$0xf]
        %v741 = vld [vmem:[#allocation5 + $0x468] sm:$0xf]
        %v742 = vld [vmem:[#allocation5 + $0x46c] sm:$0xf]
        %v743 = vld [vmem:[#allocation5 + $0x470] sm:$0xf]
        %v744 = vld [vmem:[#allocation5 + $0x474] sm:$0xf]
        %v745 = vld [vmem:[#allocation5 + $0x478] sm:$0xf]
        %v746 = vld [vmem:[#allocation5 + $0x47c] sm:$0xf]
        %v747 = vld [vmem:[#allocation5 + $0x480] sm:$0xf]
        %v748 = vld [vmem:[#allocation5 + $0x484] sm:$0xf]
        %v749 = vld [vmem:[#allocation5 + $0x488] sm:$0xf]
        %v750 = vld [vmem:[#allocation5 + $0x48c] sm:$0xf]
        %v751 = vld [vmem:[#allocation5 + $0x490] sm:$0xf]
        %v752 = vld [vmem:[#allocation5 + $0x494] sm:$0xf]
        %v753 = vld [vmem:[%s2] sm:$0x1]
        %v755 = vlaneseq
        %v756 = vshrl.u32 %v755, 7
        %v757 = vsub.s32 0, %v756
        %v758 = vrot.slane %v753, %v757
        %v1054 = vunpack.c.l.b16 %v459
        %v1055 = vunpack.c.l.b16 %v460
        %v1056 = vunpack.c.l.b16 %v461
        %v1057 = vunpack.c.l.b16 %v462
        %v1058 = vunpack.c.l.b16 %v463
        %v1059 = vunpack.c.l.b16 %v464
        %v1060 = vunpack.c.l.b16 %v465
        %v1061 = vunpack.c.l.b16 %v466
        %v1062 = vunpack.c.l.b16 %v467
        %v1063 = vunpack.c.l.b16 %v468
        %v1064 = vunpack.c.l.b16 %v469
        %v1065 = vunpack.c.l.b16 %v470
        %v1066 = vunpack.c.l.b16 %v471
        %v1067 = vunpack.c.l.b16 %v472
        %v1068 = vunpack.c.l.b16 %v473
        %v1069 = vunpack.c.l.b16 %v474
        %v1070 = vunpack.c.l.b16 %v475
        %v1071 = vunpack.c.l.b16 %v476
        %v1072 = vunpack.c.l.b16 %v477
        %v1073 = vunpack.c.l.b16 %v478
        %v1074 = vunpack.c.l.b16 %v479
        %v1075 = vunpack.c.l.b16 %v480
        %v1076 = vunpack.c.l.b16 %v481
        %v1077 = vunpack.c.l.b16 %v482
        %v1078 = vunpack.c.l.b16 %v483
        %v1079 = vunpack.c.l.b16 %v484
        %v1080 = vunpack.c.l.b16 %v485
        %v1081 = vunpack.c.l.b16 %v486
        %v1082 = vunpack.c.l.b16 %v487
        %v1083 = vunpack.c.l.b16 %v488
        %v1084 = vunpack.c.l.b16 %v489
        %v1085 = vunpack.c.l.b16 %v490
        %v1086 = vunpack.c.l.b16 %v491
        %v1087 = vunpack.c.l.b16 %v492
        %v1088 = vunpack.c.l.b16 %v493
        %v1089 = vunpack.c.l.b16 %v494
        %v1090 = vunpack.c.l.b16 %v495
        %v1091 = vunpack.c.l.b16 %v496
        %v1092 = vunpack.c.l.b16 %v497
        %v1093 = vunpack.c.l.b16 %v498
        %v1094 = vunpack.c.l.b16 %v499
        %v1095 = vunpack.c.l.b16 %v500
        %v1096 = vunpack.c.l.b16 %v501
        %v1097 = vunpack.c.l.b16 %v502
        %v1098 = vunpack.c.l.b16 %v503
        %v1099 = vunpack.c.l.b16 %v504
        %v1100 = vunpack.c.l.b16 %v505
        %v1101 = vunpack.c.l.b16 %v506
        %v1102 = vunpack.c.l.b16 %v507
        %v1103 = vunpack.c.l.b16 %v508
        %v1104 = vunpack.c.l.b16 %v509
        %v1105 = vunpack.c.l.b16 %v510
        %v1106 = vunpack.c.l.b16 %v511
        %v1107 = vunpack.c.l.b16 %v512
        %v1108 = vunpack.c.l.b16 %v513
        %v1109 = vunpack.c.l.b16 %v514
        %v1110 = vunpack.c.l.b16 %v515
        %v1111 = vunpack.c.l.b16 %v516
        %v1112 = vunpack.c.l.b16 %v517
        %v1113 = vunpack.c.l.b16 %v518
        %v1114 = vunpack.c.l.b16 %v519
        %v1115 = vunpack.c.l.b16 %v520
        %v1116 = vunpack.c.l.b16 %v521
        %v1117 = vunpack.c.l.b16 %v522
        %v1118 = vunpack.c.l.b16 %v523
        %v1119 = vunpack.c.l.b16 %v524
        %v1120 = vunpack.c.l.b16 %v525
        %v1121 = vunpack.c.l.b16 %v526
        %v1122 = vunpack.c.l.b16 %v527
        %v1123 = vunpack.c.l.b16 %v528
        %v1124 = vunpack.c.l.b16 %v529
        %v1125 = vunpack.c.l.b16 %v530
        %v1126 = vunpack.c.l.b16 %v531
        %v1127 = vunpack.c.l.b16 %v532
        %v1128 = vunpack.c.l.b16 %v533
        %v1129 = vunpack.c.l.b16 %v534
        %v1130 = vunpack.c.l.b16 %v535
        %v1131 = vunpack.c.l.b16 %v536
        %v1132 = vunpack.c.l.b16 %v537
        %v1133 = vunpack.c.l.b16 %v538
        %v1134 = vunpack.c.l.b16 %v539
        %v1135 = vunpack.c.l.b16 %v540
        %v1136 = vunpack.c.l.b16 %v541
        %v1137 = vunpack.c.l.b16 %v542
        %v1138 = vunpack.c.l.b16 %v543
        %v1139 = vunpack.c.l.b16 %v544
        %v1140 = vunpack.c.l.b16 %v545
        %v1141 = vunpack.c.l.b16 %v546
        %v1142 = vunpack.c.l.b16 %v547
        %v1143 = vunpack.c.l.b16 %v548
        %v1144 = vunpack.c.l.b16 %v549
        %v1145 = vunpack.c.l.b16 %v550
        %v1146 = vunpack.c.l.b16 %v551
        %v1147 = vunpack.c.l.b16 %v552
        %v1148 = vunpack.c.l.b16 %v553
        %v1149 = vunpack.c.l.b16 %v554
        %v1150 = vunpack.c.l.b16 %v555
        %v1151 = vunpack.c.l.b16 %v556
        %v1152 = vunpack.c.l.b16 %v557
        %v1153 = vunpack.c.l.b16 %v558
        %v1154 = vunpack.c.l.b16 %v559
        %v1155 = vunpack.c.l.b16 %v560
        %v1156 = vunpack.c.l.b16 %v561
        %v1157 = vunpack.c.l.b16 %v562
        %v1158 = vunpack.c.l.b16 %v563
        %v1159 = vunpack.c.l.b16 %v564
        %v1160 = vunpack.c.l.b16 %v565
        %v1161 = vunpack.c.l.b16 %v566
        %v1162 = vunpack.c.l.b16 %v567
        %v1163 = vunpack.c.l.b16 %v568
        %v1164 = vunpack.c.l.b16 %v569
        %v1165 = vunpack.c.l.b16 %v570
        %v1166 = vunpack.c.l.b16 %v571
        %v1167 = vunpack.c.l.b16 %v572
        %v1168 = vunpack.c.l.b16 %v573
        %v1169 = vunpack.c.l.b16 %v574
        %v1170 = vunpack.c.l.b16 %v575
        %v1171 = vunpack.c.l.b16 %v576
        %v1172 = vunpack.c.l.b16 %v577
        %v1173 = vunpack.c.l.b16 %v578
        %v1174 = vunpack.c.l.b16 %v579
        %v1175 = vunpack.c.l.b16 %v580
        %v1176 = vunpack.c.l.b16 %v581
        %v1177 = vunpack.c.l.b16 %v582
        %v1178 = vunpack.c.l.b16 %v583
        %v1179 = vunpack.c.l.b16 %v584
        %v1180 = vunpack.c.l.b16 %v585
        %v1181 = vunpack.c.l.b16 %v586
        %v1182 = vunpack.c.l.b16 %v587
        %v1183 = vunpack.c.l.b16 %v588
        %v1184 = vunpack.c.l.b16 %v589
        %v1185 = vunpack.c.l.b16 %v590
        %v1186 = vunpack.c.l.b16 %v591
        %v1187 = vunpack.c.l.b16 %v592
        %v1188 = vunpack.c.l.b16 %v593
        %v1189 = vunpack.c.l.b16 %v594
        %v1190 = vunpack.c.l.b16 %v595
        %v1191 = vunpack.c.l.b16 %v596
        %v1192 = vunpack.c.l.b16 %v597
        %v1193 = vunpack.c.l.b16 %v598
        %v1194 = vunpack.c.l.b16 %v599
        %v1195 = vunpack.c.l.b16 %v600
        %v1196 = vunpack.c.l.b16 %v601
        %v1197 = vunpack.c.l.b16 %v602
        %v1198 = vunpack.c.l.b16 %v603
        %v1199 = vunpack.c.l.b16 %v604
        %v1200 = vunpack.c.l.b16 %v605
        %v1201 = vunpack.c.l.b16 %v606
        %v1202 = vunpack.c.l.b16 %v607
        %v1203 = vunpack.c.l.b16 %v608
        %v1204 = vunpack.c.l.b16 %v609
        %v1205 = vunpack.c.l.b16 %v610
        %v1206 = vunpack.c.l.b16 %v611
        %v1207 = vunpack.c.l.b16 %v612
        %v1208 = vunpack.c.l.b16 %v613
        %v1209 = vunpack.c.l.b16 %v614
        %v1210 = vunpack.c.l.b16 %v615
        %v1211 = vunpack.c.l.b16 %v616
        %v1212 = vunpack.c.l.b16 %v617
        %v1213 = vunpack.c.l.b16 %v618
        %v1214 = vunpack.c.l.b16 %v619
        %v1215 = vunpack.c.l.b16 %v620
        %v1216 = vunpack.c.l.b16 %v621
        %v1217 = vunpack.c.l.b16 %v622
        %v1218 = vunpack.c.l.b16 %v623
        %v1219 = vunpack.c.l.b16 %v624
        %v1220 = vunpack.c.l.b16 %v625
        %v1221 = vunpack.c.l.b16 %v626
        %v1222 = vunpack.c.l.b16 %v627
        %v1223 = vunpack.c.l.b16 %v628
        %v1224 = vunpack.c.l.b16 %v629
        %v1225 = vunpack.c.l.b16 %v630
        %v1226 = vunpack.c.l.b16 %v631
        %v1227 = vunpack.c.l.b16 %v632
        %v1228 = vunpack.c.l.b16 %v633
        %v1229 = vunpack.c.l.b16 %v634
        %v1230 = vunpack.c.l.b16 %v635
        %v1231 = vunpack.c.l.b16 %v636
        %v1232 = vunpack.c.l.b16 %v637
        %v1233 = vunpack.c.l.b16 %v638
        %v1234 = vunpack.c.l.b16 %v639
        %v1235 = vunpack.c.l.b16 %v640
        %v1236 = vunpack.c.l.b16 %v641
        %v1237 = vunpack.c.l.b16 %v642
        %v1238 = vunpack.c.l.b16 %v643
        %v1239 = vunpack.c.l.b16 %v644
        %v1240 = vunpack.c.l.b16 %v645
        %v1241 = vunpack.c.l.b16 %v646
        %v1242 = vunpack.c.l.b16 %v647
        %v1243 = vunpack.c.l.b16 %v648
        %v1244 = vunpack.c.l.b16 %v649
        %v1245 = vunpack.c.l.b16 %v650
        %v1246 = vunpack.c.l.b16 %v651
        %v1247 = vunpack.c.l.b16 %v652
        %v1248 = vunpack.c.l.b16 %v653
        %v1249 = vunpack.c.l.b16 %v654
        %v1250 = vunpack.c.l.b16 %v655
        %v1251 = vunpack.c.l.b16 %v656
        %v1252 = vunpack.c.l.b16 %v657
        %v1253 = vunpack.c.l.b16 %v658
        %v1254 = vunpack.c.l.b16 %v659
        %v1255 = vunpack.c.l.b16 %v660
        %v1256 = vunpack.c.l.b16 %v661
        %v1257 = vunpack.c.l.b16 %v662
        %v1258 = vunpack.c.l.b16 %v663
        %v1259 = vunpack.c.l.b16 %v664
        %v1260 = vunpack.c.l.b16 %v665
        %v1261 = vunpack.c.l.b16 %v666
        %v1262 = vunpack.c.l.b16 %v667
        %v1263 = vunpack.c.l.b16 %v668
        %v1264 = vunpack.c.l.b16 %v669
        %v1265 = vunpack.c.l.b16 %v670
        %v1266 = vunpack.c.l.b16 %v671
        %v1267 = vunpack.c.l.b16 %v672
        %v1268 = vunpack.c.l.b16 %v673
        %v1269 = vunpack.c.l.b16 %v674
        %v1270 = vunpack.c.l.b16 %v675
        %v1271 = vunpack.c.l.b16 %v676
        %v1272 = vunpack.c.l.b16 %v677
        %v1273 = vunpack.c.l.b16 %v678
        %v1274 = vunpack.c.l.b16 %v679
        %v1275 = vunpack.c.l.b16 %v680
        %v1276 = vunpack.c.l.b16 %v681
        %v1277 = vunpack.c.l.b16 %v682
        %v1278 = vunpack.c.l.b16 %v683
        %v1279 = vunpack.c.l.b16 %v684
        %v1280 = vunpack.c.l.b16 %v685
        %v1281 = vunpack.c.l.b16 %v686
        %v1282 = vunpack.c.l.b16 %v687
        %v1283 = vunpack.c.l.b16 %v688
        %v1284 = vunpack.c.l.b16 %v689
        %v1285 = vunpack.c.l.b16 %v690
        %v1286 = vunpack.c.l.b16 %v691
        %v1287 = vunpack.c.l.b16 %v692
        %v1288 = vunpack.c.l.b16 %v693
        %v1289 = vunpack.c.l.b16 %v694
        %v1290 = vunpack.c.l.b16 %v695
        %v1291 = vunpack.c.l.b16 %v696
        %v1292 = vunpack.c.l.b16 %v697
        %v1293 = vunpack.c.l.b16 %v698
        %v1294 = vunpack.c.l.b16 %v699
        %v1295 = vunpack.c.l.b16 %v700
        %v1296 = vunpack.c.l.b16 %v701
        %v1297 = vunpack.c.l.b16 %v702
        %v1298 = vunpack.c.l.b16 %v703
        %v1299 = vunpack.c.l.b16 %v704
        %v1300 = vunpack.c.l.b16 %v705
        %v1301 = vunpack.c.l.b16 %v706
        %v1302 = vunpack.c.l.b16 %v707
        %v1303 = vunpack.c.l.b16 %v708
        %v1304 = vunpack.c.l.b16 %v709
        %v1305 = vunpack.c.l.b16 %v710
        %v1306 = vunpack.c.l.b16 %v711
        %v1307 = vunpack.c.l.b16 %v712
        %v1308 = vunpack.c.l.b16 %v713
        %v1309 = vunpack.c.l.b16 %v714
        %v1310 = vunpack.c.l.b16 %v715
        %v1311 = vunpack.c.l.b16 %v716
        %v1312 = vunpack.c.l.b16 %v717
        %v1313 = vunpack.c.l.b16 %v718
        %v1314 = vunpack.c.l.b16 %v719
        %v1315 = vunpack.c.l.b16 %v720
        %v1316 = vunpack.c.l.b16 %v721
        %v1317 = vunpack.c.l.b16 %v722
        %v1318 = vunpack.c.l.b16 %v723
        %v1319 = vunpack.c.l.b16 %v724
        %v1320 = vunpack.c.l.b16 %v725
        %v1321 = vunpack.c.l.b16 %v726
        %v1322 = vunpack.c.l.b16 %v727
        %v1323 = vunpack.c.l.b16 %v728
        %v1324 = vunpack.c.l.b16 %v729
        %v1325 = vunpack.c.l.b16 %v730
        %v1326 = vunpack.c.l.b16 %v731
        %v1327 = vunpack.c.l.b16 %v732
        %v1328 = vunpack.c.l.b16 %v733
        %v1329 = vunpack.c.l.b16 %v734
        %v1330 = vunpack.c.l.b16 %v735
        %v1331 = vunpack.c.l.b16 %v736
        %v1332 = vunpack.c.l.b16 %v737
        %v1333 = vunpack.c.l.b16 %v738
        %v1334 = vunpack.c.l.b16 %v739
        %v1335 = vunpack.c.l.b16 %v740
        %v1336 = vunpack.c.l.b16 %v741
        %v1337 = vunpack.c.l.b16 %v742
        %v1338 = vunpack.c.l.b16 %v743
        %v1339 = vunpack.c.l.b16 %v744
        %v1340 = vunpack.c.l.b16 %v745
        %v1341 = vunpack.c.l.b16 %v746
        %v1342 = vunpack.c.l.b16 %v747
        %v1343 = vunpack.c.l.b16 %v748
        %v1344 = vunpack.c.l.b16 %v749
        %v1345 = vunpack.c.l.b16 %v750
        %v1346 = vunpack.c.l.b16 %v751
        %v1347 = vunpack.c.l.b16 %v752
        %v1348 = vpack.c.b16 %v1055, %v1054
        %v1349 = vpack.c.b16 %v1057, %v1056
        %v1350 = vpack.c.b16 %v1059, %v1058
        %v1351 = vpack.c.b16 %v1061, %v1060
        %v1352 = vpack.c.b16 %v1063, %v1062
        %v1353 = vpack.c.b16 %v1065, %v1064
        %v1354 = vpack.c.b16 %v1067, %v1066
        %v1355 = vpack.c.b16 %v1069, %v1068
        %v1356 = vpack.c.b16 %v1071, %v1070
        %v1357 = vpack.c.b16 %v1073, %v1072
        %v1358 = vpack.c.b16 %v1075, %v1074
        %v1359 = vpack.c.b16 %v1077, %v1076
        %v1360 = vpack.c.b16 %v1079, %v1078
        %v1361 = vpack.c.b16 %v1081, %v1080
        %v1362 = vpack.c.b16 %v1083, %v1082
        %v1363 = vpack.c.b16 %v1085, %v1084
        %v1364 = vpack.c.b16 %v1087, %v1086
        %v1365 = vpack.c.b16 %v1089, %v1088
        %v1366 = vpack.c.b16 %v1091, %v1090
        %v1367 = vpack.c.b16 %v1093, %v1092
        %v1368 = vpack.c.b16 %v1095, %v1094
        %v1369 = vpack.c.b16 %v1097, %v1096
        %v1370 = vpack.c.b16 %v1099, %v1098
        %v1371 = vpack.c.b16 %v1101, %v1100
        %v1372 = vpack.c.b16 %v1103, %v1102
        %v1373 = vpack.c.b16 %v1105, %v1104
        %v1374 = vpack.c.b16 %v1107, %v1106
        %v1375 = vpack.c.b16 %v1109, %v1108
        %v1376 = vpack.c.b16 %v1111, %v1110
        %v1377 = vpack.c.b16 %v1113, %v1112
        %v1378 = vpack.c.b16 %v1115, %v1114
        %v1379 = vpack.c.b16 %v1117, %v1116
        %v1380 = vpack.c.b16 %v1119, %v1118
        %v1381 = vpack.c.b16 %v1121, %v1120
        %v1382 = vpack.c.b16 %v1123, %v1122
        %v1383 = vpack.c.b16 %v1125, %v1124
        %v1384 = vpack.c.b16 %v1127, %v1126
        %v1385 = vpack.c.b16 %v1129, %v1128
        %v1386 = vpack.c.b16 %v1131, %v1130
        %v1387 = vpack.c.b16 %v1133, %v1132
        %v1388 = vpack.c.b16 %v1135, %v1134
        %v1389 = vpack.c.b16 %v1137, %v1136
        %v1390 = vpack.c.b16 %v1139, %v1138
        %v1391 = vpack.c.b16 %v1141, %v1140
        %v1392 = vpack.c.b16 %v1143, %v1142
        %v1393 = vpack.c.b16 %v1145, %v1144
        %v1394 = vpack.c.b16 %v1147, %v1146
        %v1395 = vpack.c.b16 %v1149, %v1148
        %v1396 = vpack.c.b16 %v1151, %v1150
        %v1397 = vpack.c.b16 %v1153, %v1152
        %v1398 = vpack.c.b16 %v1155, %v1154
        %v1399 = vpack.c.b16 %v1157, %v1156
        %v1400 = vpack.c.b16 %v1159, %v1158
        %v1401 = vpack.c.b16 %v1161, %v1160
        %v1402 = vpack.c.b16 %v1163, %v1162
        %v1403 = vpack.c.b16 %v1165, %v1164
        %v1404 = vpack.c.b16 %v1167, %v1166
        %v1405 = vpack.c.b16 %v1169, %v1168
        %v1406 = vpack.c.b16 %v1171, %v1170
        %v1407 = vpack.c.b16 %v1173, %v1172
        %v1408 = vpack.c.b16 %v1175, %v1174
        %v1409 = vpack.c.b16 %v1177, %v1176
        %v1410 = vpack.c.b16 %v1179, %v1178
        %v1411 = vpack.c.b16 %v1181, %v1180
        %v1412 = vpack.c.b16 %v1183, %v1182
        %v1413 = vpack.c.b16 %v1185, %v1184
        %v1414 = vpack.c.b16 %v1187, %v1186
        %v1415 = vpack.c.b16 %v1189, %v1188
        %v1416 = vpack.c.b16 %v1191, %v1190
        %v1417 = vpack.c.b16 %v1193, %v1192
        %v1418 = vpack.c.b16 %v1195, %v1194
        %v1419 = vpack.c.b16 %v1197, %v1196
        %v1420 = vpack.c.b16 %v1199, %v1198
        %v1421 = vpack.c.b16 %v1201, %v1200
        %v1422 = vpack.c.b16 %v1203, %v1202
        %v1423 = vpack.c.b16 %v1205, %v1204
        %v1424 = vpack.c.b16 %v1207, %v1206
        %v1425 = vpack.c.b16 %v1209, %v1208
        %v1426 = vpack.c.b16 %v1211, %v1210
        %v1427 = vpack.c.b16 %v1213, %v1212
        %v1428 = vpack.c.b16 %v1215, %v1214
        %v1429 = vpack.c.b16 %v1217, %v1216
        %v1430 = vpack.c.b16 %v1219, %v1218
        %v1431 = vpack.c.b16 %v1221, %v1220
        %v1432 = vpack.c.b16 %v1223, %v1222
        %v1433 = vpack.c.b16 %v1225, %v1224
        %v1434 = vpack.c.b16 %v1227, %v1226
        %v1435 = vpack.c.b16 %v1229, %v1228
        %v1436 = vpack.c.b16 %v1231, %v1230
        %v1437 = vpack.c.b16 %v1233, %v1232
        %v1438 = vpack.c.b16 %v1235, %v1234
        %v1439 = vpack.c.b16 %v1237, %v1236
        %v1440 = vpack.c.b16 %v1239, %v1238
        %v1441 = vpack.c.b16 %v1241, %v1240
        %v1442 = vpack.c.b16 %v1243, %v1242
        %v1443 = vpack.c.b16 %v1245, %v1244
        %v1444 = vpack.c.b16 %v1247, %v1246
        %v1445 = vpack.c.b16 %v1249, %v1248
        %v1446 = vpack.c.b16 %v1251, %v1250
        %v1447 = vpack.c.b16 %v1253, %v1252
        %v1448 = vpack.c.b16 %v1255, %v1254
        %v1449 = vpack.c.b16 %v1257, %v1256
        %v1450 = vpack.c.b16 %v1259, %v1258
        %v1451 = vpack.c.b16 %v1261, %v1260
        %v1452 = vpack.c.b16 %v1263, %v1262
        %v1453 = vpack.c.b16 %v1265, %v1264
        %v1454 = vpack.c.b16 %v1267, %v1266
        %v1455 = vpack.c.b16 %v1269, %v1268
        %v1456 = vpack.c.b16 %v1271, %v1270
        %v1457 = vpack.c.b16 %v1273, %v1272
        %v1458 = vpack.c.b16 %v1275, %v1274
        %v1459 = vpack.c.b16 %v1277, %v1276
        %v1460 = vpack.c.b16 %v1279, %v1278
        %v1461 = vpack.c.b16 %v1281, %v1280
        %v1462 = vpack.c.b16 %v1283, %v1282
        %v1463 = vpack.c.b16 %v1285, %v1284
        %v1464 = vpack.c.b16 %v1287, %v1286
        %v1465 = vpack.c.b16 %v1289, %v1288
        %v1466 = vpack.c.b16 %v1291, %v1290
        %v1467 = vpack.c.b16 %v1293, %v1292
        %v1468 = vpack.c.b16 %v1295, %v1294
        %v1469 = vpack.c.b16 %v1297, %v1296
        %v1470 = vpack.c.b16 %v1299, %v1298
        %v1471 = vpack.c.b16 %v1301, %v1300
        %v1472 = vpack.c.b16 %v1303, %v1302
        %v1473 = vpack.c.b16 %v1305, %v1304
        %v1474 = vpack.c.b16 %v1307, %v1306
        %v1475 = vpack.c.b16 %v1309, %v1308
        %v1476 = vpack.c.b16 %v1311, %v1310
        %v1477 = vpack.c.b16 %v1313, %v1312
        %v1478 = vpack.c.b16 %v1315, %v1314
        %v1479 = vpack.c.b16 %v1317, %v1316
        %v1480 = vpack.c.b16 %v1319, %v1318
        %v1481 = vpack.c.b16 %v1321, %v1320
        %v1482 = vpack.c.b16 %v1323, %v1322
        %v1483 = vpack.c.b16 %v1325, %v1324
        %v1484 = vpack.c.b16 %v1327, %v1326
        %v1485 = vpack.c.b16 %v1329, %v1328
        %v1486 = vpack.c.b16 %v1331, %v1330
        %v1487 = vpack.c.b16 %v1333, %v1332
        %v1488 = vpack.c.b16 %v1335, %v1334
        %v1489 = vpack.c.b16 %v1337, %v1336
        %v1490 = vpack.c.b16 %v1339, %v1338
        %v1491 = vpack.c.b16 %v1341, %v1340
        %v1492 = vpack.c.b16 %v1343, %v1342
        %v1493 = vpack.c.b16 %v1345, %v1344
        %v1494 = vpack.c.b16 %v1347, %v1346
        %vm1642 = vcmask 392192
        %v1644 = vsel %vm1642, %v439, 0
        %v1647 = vsel %vm1642, %v458, 0
        %1649 = vmatprep.subr.bf16.mxu0 0
        %1650 = vmatpush1.bf16.msra.mxu0 %v1348
        %1651 = vmatprep.subr.bf16.mxu0 0
        %1652 = vmatpush1.bf16.msra.mxu0 %v1349
        %1653 = vmatprep.subr.bf16.mxu0 0
        %1654 = vmatpush1.bf16.msra.mxu0 %v1350
        %1655 = vmatprep.subr.bf16.mxu0 0
        %1656 = vmatpush1.bf16.msra.mxu0 %v1351
        %1657 = vmatprep.subr.bf16.mxu0 0
        %1658 = vmatpush1.bf16.msra.mxu0 %v1352
        %1659 = vmatprep.subr.bf16.mxu0 0
        %1660 = vmatpush1.bf16.msra.mxu0 %v1353
        %1661 = vmatprep.subr.bf16.mxu0 0
        %1662 = vmatpush1.bf16.msra.mxu0 %v1354
        %1663 = vmatprep.subr.bf16.mxu0 0
        %1664 = vmatpush1.bf16.msra.mxu0 %v1355
        %1665 = vmatprep.subr.bf16.mxu0 0
        %1666 = vmatpush1.bf16.msra.mxu0 %v1356
        %1667 = vmatprep.subr.bf16.mxu0 0
        %1668 = vmatpush1.bf16.msra.mxu0 %v1357
        %1669 = vmatprep.subr.bf16.mxu0 0
        %1670 = vmatpush1.bf16.msra.mxu0 %v1358
        %1671 = vmatprep.subr.bf16.mxu0 0
        %1672 = vmatpush1.bf16.msra.mxu0 %v1359
        %1673 = vmatprep.subr.bf16.mxu0 0
        %1674 = vmatpush1.bf16.msra.mxu0 %v1360
        %1675 = vmatprep.subr.bf16.mxu0 0
        %1676 = vmatpush1.bf16.msra.mxu0 %v1361
        %1677 = vmatprep.subr.bf16.mxu0 0
        %1678 = vmatpush1.bf16.msra.mxu0 %v1362
        %1679 = vmatprep.subr.bf16.mxu0 0
        %1680 = vmatpush1.bf16.msra.mxu0 %v1363
        %1681 = vmatprep.mubr.bf16.mxu0 %v422
        %1682 = vmatmul.mubr.bf16.gmra.mrb[0].mxu0 %v421
        %v1683 = vpop.f32.mrb[0].mxu0
        %v1684 = vadd.f32 %v758, %v1683
        %v1685 = vpop.f32.mrb[0].mxu0
        %v1686 = vpop.f32.mrb[0].mxu0
        %v1687 = vadd.f32 %v758, %v1686
        %v1688 = vpop.f32.mrb[0].mxu0
        %1689 = vmatprep.mubr.bf16.mxu0 %v441
        %1690 = vmatmul.mubr.bf16.gmra.mrb[0].mxu0 %v440
        %v1691 = vpop.f32.mrb[0].mxu0
        %v1692 = vadd.f32 %v758, %v1691
        %v1693 = vpop.f32.mrb[0].mxu0
        %v1694 = vpop.f32.mrb[0].mxu0
        %v1695 = vadd.f32 %v758, %v1694
        %v1696 = vpop.f32.mrb[0].mxu0
        %1697 = vdwg.mxu0
        %1698 = vmatprep.subr.bf16.mxu0 0
        %1699 = vmatpush1.bf16.msra.mxu0 %v1364
        %1700 = vmatprep.subr.bf16.mxu0 0
        %1701 = vmatpush1.bf16.msra.mxu0 %v1365
        %1702 = vmatprep.subr.bf16.mxu0 0
        %1703 = vmatpush1.bf16.msra.mxu0 %v1366
        %1704 = vmatprep.subr.bf16.mxu0 0
        %1705 = vmatpush1.bf16.msra.mxu0 %v1367
        %1706 = vmatprep.subr.bf16.mxu0 0
        %1707 = vmatpush1.bf16.msra.mxu0 %v1368
        %1708 = vmatprep.subr.bf16.mxu0 0
        %1709 = vmatpush1.bf16.msra.mxu0 %v1369
        %1710 = vmatprep.subr.bf16.mxu0 0
        %1711 = vmatpush1.bf16.msra.mxu0 %v1370
        %1712 = vmatprep.subr.bf16.mxu0 0
        %1713 = vmatpush1.bf16.msra.mxu0 %v1371
        %1714 = vmatprep.subr.bf16.mxu0 0
        %1715 = vmatpush1.bf16.msra.mxu0 %v1372
        %1716 = vmatprep.subr.bf16.mxu0 0
        %1717 = vmatpush1.bf16.msra.mxu0 %v1373
        %1718 = vmatprep.subr.bf16.mxu0 0
        %1719 = vmatpush1.bf16.msra.mxu0 %v1374
        %1720 = vmatprep.subr.bf16.mxu0 0
        %1721 = vmatpush1.bf16.msra.mxu0 %v1375
        %1722 = vmatprep.subr.bf16.mxu0 0
        %1723 = vmatpush1.bf16.msra.mxu0 %v1376
        %1724 = vmatprep.subr.bf16.mxu0 0
        %1725 = vmatpush1.bf16.msra.mxu0 %v1377
        %1726 = vmatprep.subr.bf16.mxu0 0
        %1727 = vmatpush1.bf16.msra.mxu0 %v1378
        %1728 = vmatprep.subr.bf16.mxu0 0
        %1729 = vmatpush1.bf16.msra.mxu0 %v1379
        %1730 = vmatprep.mubr.bf16.mxu0 %v424
        %1731 = vmatmul.mubr.bf16.gmra.mrb[0].mxu0 %v423
        %v1732 = vpop.f32.mrb[0].mxu0
        %v1733 = vadd.f32 %v1684, %v1732
        %v1734 = vpop.f32.mrb[0].mxu0
        %v1735 = vpop.f32.mrb[0].mxu0
        %v1736 = vadd.f32 %v1687, %v1735
        %v1737 = vpop.f32.mrb[0].mxu0
        %1738 = vmatprep.mubr.bf16.mxu0 %v443
        %1739 = vmatmul.mubr.bf16.gmra.mrb[0].mxu0 %v442
        %v1740 = vpop.f32.mrb[0].mxu0
        %v1741 = vadd.f32 %v1692, %v1740
        %v1742 = vpop.f32.mrb[0].mxu0
        %v1743 = vpop.f32.mrb[0].mxu0
        %v1744 = vadd.f32 %v1695, %v1743
        %v1745 = vpop.f32.mrb[0].mxu0
        %1746 = vdwg.mxu0
        %1747 = vmatprep.subr.bf16.mxu0 0
        %1748 = vmatpush1.bf16.msra.mxu0 %v1380
        %1749 = vmatprep.subr.bf16.mxu0 0
        %1750 = vmatpush1.bf16.msra.mxu0 %v1381
        %1751 = vmatprep.subr.bf16.mxu0 0
        %1752 = vmatpush1.bf16.msra.mxu0 %v1382
        %1753 = vmatprep.subr.bf16.mxu0 0
        %1754 = vmatpush1.bf16.msra.mxu0 %v1383
        %1755 = vmatprep.subr.bf16.mxu0 0
        %1756 = vmatpush1.bf16.msra.mxu0 %v1384
        %1757 = vmatprep.subr.bf16.mxu0 0
        %1758 = vmatpush1.bf16.msra.mxu0 %v1385
        %1759 = vmatprep.subr.bf16.mxu0 0
        %1760 = vmatpush1.bf16.msra.mxu0 %v1386
        %1761 = vmatprep.subr.bf16.mxu0 0
        %1762 = vmatpush1.bf16.msra.mxu0 %v1387
        %1763 = vmatprep.subr.bf16.mxu0 0
        %1764 = vmatpush1.bf16.msra.mxu0 %v1388
        %1765 = vmatprep.subr.bf16.mxu0 0
        %1766 = vmatpush1.bf16.msra.mxu0 %v1389
        %1767 = vmatprep.subr.bf16.mxu0 0
        %1768 = vmatpush1.bf16.msra.mxu0 %v1390
        %1769 = vmatprep.subr.bf16.mxu0 0
        %1770 = vmatpush1.bf16.msra.mxu0 %v1391
        %1771 = vmatprep.subr.bf16.mxu0 0
        %1772 = vmatpush1.bf16.msra.mxu0 %v1392
        %1773 = vmatprep.subr.bf16.mxu0 0
        %1774 = vmatpush1.bf16.msra.mxu0 %v1393
        %1775 = vmatprep.subr.bf16.mxu0 0
        %1776 = vmatpush1.bf16.msra.mxu0 %v1394
        %1777 = vmatprep.subr.bf16.mxu0 0
        %1778 = vmatpush1.bf16.msra.mxu0 %v1395
        %1779 = vmatprep.mubr.bf16.mxu0 %v426
        %1780 = vmatmul.mubr.bf16.gmra.mrb[0].mxu0 %v425
        %v1781 = vpop.f32.mrb[0].mxu0
        %v1782 = vadd.f32 %v1733, %v1781
        %v1783 = vpop.f32.mrb[0].mxu0
        %v1784 = vpop.f32.mrb[0].mxu0
        %v1785 = vadd.f32 %v1736, %v1784
        %v1786 = vpop.f32.mrb[0].mxu0
        %1787 = vmatprep.mubr.bf16.mxu0 %v445
        %1788 = vmatmul.mubr.bf16.gmra.mrb[0].mxu0 %v444
        %v1789 = vpop.f32.mrb[0].mxu0
        %v1790 = vadd.f32 %v1741, %v1789
        %v1791 = vpop.f32.mrb[0].mxu0
        %v1792 = vpop.f32.mrb[0].mxu0
        %v1793 = vadd.f32 %v1744, %v1792
        %v1794 = vpop.f32.mrb[0].mxu0
        %1795 = vdwg.mxu0
        %1796 = vmatprep.subr.bf16.mxu0 0
        %1797 = vmatpush1.bf16.msra.mxu0 %v1396
        %1798 = vmatprep.subr.bf16.mxu0 0
        %1799 = vmatpush1.bf16.msra.mxu0 %v1397
        %1800 = vmatprep.subr.bf16.mxu0 0
        %1801 = vmatpush1.bf16.msra.mxu0 %v1398
        %1802 = vmatprep.subr.bf16.mxu0 0
        %1803 = vmatpush1.bf16.msra.mxu0 %v1399
        %1804 = vmatprep.subr.bf16.mxu0 0
        %1805 = vmatpush1.bf16.msra.mxu0 %v1400
        %1806 = vmatprep.subr.bf16.mxu0 0
        %1807 = vmatpush1.bf16.msra.mxu0 %v1401
        %1808 = vmatprep.subr.bf16.mxu0 0
        %1809 = vmatpush1.bf16.msra.mxu0 %v1402
        %1810 = vmatprep.subr.bf16.mxu0 0
        %1811 = vmatpush1.bf16.msra.mxu0 %v1403
        %1812 = vmatprep.subr.bf16.mxu0 0
        %1813 = vmatpush1.bf16.msra.mxu0 %v1404
        %1814 = vmatprep.subr.bf16.mxu0 0
        %1815 = vmatpush1.bf16.msra.mxu0 %v1405
        %1816 = vmatprep.subr.bf16.mxu0 0
        %1817 = vmatpush1.bf16.msra.mxu0 %v1406
        %1818 = vmatprep.subr.bf16.mxu0 0
        %1819 = vmatpush1.bf16.msra.mxu0 %v1407
        %1820 = vmatprep.subr.bf16.mxu0 0
        %1821 = vmatpush1.bf16.msra.mxu0 %v1408
        %1822 = vmatprep.subr.bf16.mxu0 0
        %1823 = vmatpush1.bf16.msra.mxu0 %v1409
        %1824 = vmatprep.subr.bf16.mxu0 0
        %1825 = vmatpush1.bf16.msra.mxu0 %v1410
        %1826 = vmatprep.subr.bf16.mxu0 0
        %1827 = vmatpush1.bf16.msra.mxu0 %v1411
        %1828 = vmatprep.mubr.bf16.mxu0 %v428
        %1829 = vmatmul.mubr.bf16.gmra.mrb[0].mxu0 %v427
        %v1830 = vpop.f32.mrb[0].mxu0
        %v1831 = vadd.f32 %v1782, %v1830
        %v1832 = vpop.f32.mrb[0].mxu0
        %v1833 = vpop.f32.mrb[0].mxu0
        %v1834 = vadd.f32 %v1785, %v1833
        %v1835 = vpop.f32.mrb[0].mxu0
        %1836 = vmatprep.mubr.bf16.mxu0 %v447
        %1837 = vmatmul.mubr.bf16.gmra.mrb[0].mxu0 %v446
        %v1838 = vpop.f32.mrb[0].mxu0
        %v1839 = vadd.f32 %v1790, %v1838
        %v1840 = vpop.f32.mrb[0].mxu0
        %v1841 = vpop.f32.mrb[0].mxu0
        %v1842 = vadd.f32 %v1793, %v1841
        %v1843 = vpop.f32.mrb[0].mxu0
        %1844 = vdwg.mxu0
        %1845 = vmatprep.subr.bf16.mxu0 0
        %1846 = vmatpush1.bf16.msra.mxu0 %v1412
        %1847 = vmatprep.subr.bf16.mxu0 0
        %1848 = vmatpush1.bf16.msra.mxu0 %v1413
        %1849 = vmatprep.subr.bf16.mxu0 0
        %1850 = vmatpush1.bf16.msra.mxu0 %v1414
        %1851 = vmatprep.subr.bf16.mxu0 0
        %1852 = vmatpush1.bf16.msra.mxu0 %v1415
        %1853 = vmatprep.subr.bf16.mxu0 0
        %1854 = vmatpush1.bf16.msra.mxu0 %v1416
        %1855 = vmatprep.subr.bf16.mxu0 0
        %1856 = vmatpush1.bf16.msra.mxu0 %v1417
        %1857 = vmatprep.subr.bf16.mxu0 0
        %1858 = vmatpush1.bf16.msra.mxu0 %v1418
        %1859 = vmatprep.subr.bf16.mxu0 0
        %1860 = vmatpush1.bf16.msra.mxu0 %v1419
        %1861 = vmatprep.subr.bf16.mxu0 0
        %1862 = vmatpush1.bf16.msra.mxu0 %v1420
        %1863 = vmatprep.subr.bf16.mxu0 0
        %1864 = vmatpush1.bf16.msra.mxu0 %v1421
        %1865 = vmatprep.subr.bf16.mxu0 0
        %1866 = vmatpush1.bf16.msra.mxu0 %v1422
        %1867 = vmatprep.subr.bf16.mxu0 0
        %1868 = vmatpush1.bf16.msra.mxu0 %v1423
        %1869 = vmatprep.subr.bf16.mxu0 0
        %1870 = vmatpush1.bf16.msra.mxu0 %v1424
        %1871 = vmatprep.subr.bf16.mxu0 0
        %1872 = vmatpush1.bf16.msra.mxu0 %v1425
        %1873 = vmatprep.subr.bf16.mxu0 0
        %1874 = vmatpush1.bf16.msra.mxu0 %v1426
        %1875 = vmatprep.subr.bf16.mxu0 0
        %1876 = vmatpush1.bf16.msra.mxu0 %v1427
        %1877 = vmatprep.mubr.bf16.mxu0 %v430
        %1878 = vmatmul.mubr.bf16.gmra.mrb[0].mxu0 %v429
        %v1879 = vpop.f32.mrb[0].mxu0
        %v1880 = vadd.f32 %v1831, %v1879
        %v1881 = vpop.f32.mrb[0].mxu0
        %v1882 = vpop.f32.mrb[0].mxu0
        %v1883 = vadd.f32 %v1834, %v1882
        %v1884 = vpop.f32.mrb[0].mxu0
        %1885 = vmatprep.mubr.bf16.mxu0 %v449
        %1886 = vmatmul.mubr.bf16.gmra.mrb[0].mxu0 %v448
        %v1887 = vpop.f32.mrb[0].mxu0
        %v1888 = vadd.f32 %v1839, %v1887
        %v1889 = vpop.f32.mrb[0].mxu0
        %v1890 = vpop.f32.mrb[0].mxu0
        %v1891 = vadd.f32 %v1842, %v1890
        %v1892 = vpop.f32.mrb[0].mxu0
        %1893 = vdwg.mxu0
        %1894 = vmatprep.subr.bf16.mxu0 0
        %1895 = vmatpush1.bf16.msra.mxu0 %v1428
        %1896 = vmatprep.subr.bf16.mxu0 0
        %1897 = vmatpush1.bf16.msra.mxu0 %v1429
        %1898 = vmatprep.subr.bf16.mxu0 0
        %1899 = vmatpush1.bf16.msra.mxu0 %v1430
        %1900 = vmatprep.subr.bf16.mxu0 0
        %1901 = vmatpush1.bf16.msra.mxu0 %v1431
        %1902 = vmatprep.subr.bf16.mxu0 0
        %1903 = vmatpush1.bf16.msra.mxu0 %v1432
        %1904 = vmatprep.subr.bf16.mxu0 0
        %1905 = vmatpush1.bf16.msra.mxu0 %v1433
        %1906 = vmatprep.subr.bf16.mxu0 0
        %1907 = vmatpush1.bf16.msra.mxu0 %v1434
        %1908 = vmatprep.subr.bf16.mxu0 0
        %1909 = vmatpush1.bf16.msra.mxu0 %v1435
        %1910 = vmatprep.subr.bf16.mxu0 0
        %1911 = vmatpush1.bf16.msra.mxu0 %v1436
        %1912 = vmatprep.subr.bf16.mxu0 0
        %1913 = vmatpush1.bf16.msra.mxu0 %v1437
        %1914 = vmatprep.subr.bf16.mxu0 0
        %1915 = vmatpush1.bf16.msra.mxu0 %v1438
        %1916 = vmatprep.subr.bf16.mxu0 0
        %1917 = vmatpush1.bf16.msra.mxu0 %v1439
        %1918 = vmatprep.subr.bf16.mxu0 0
        %1919 = vmatpush1.bf16.msra.mxu0 %v1440
        %1920 = vmatprep.subr.bf16.mxu0 0
        %1921 = vmatpush1.bf16.msra.mxu0 %v1441
        %1922 = vmatprep.subr.bf16.mxu0 0
        %1923 = vmatpush1.bf16.msra.mxu0 %v1442
        %1924 = vmatprep.subr.bf16.mxu0 0
        %1925 = vmatpush1.bf16.msra.mxu0 %v1443
        %1926 = vmatprep.mubr.bf16.mxu0 %v432
        %1927 = vmatmul.mubr.bf16.gmra.mrb[0].mxu0 %v431
        %v1928 = vpop.f32.mrb[0].mxu0
        %v1929 = vadd.f32 %v1880, %v1928
        %v1930 = vpop.f32.mrb[0].mxu0
        %v1931 = vpop.f32.mrb[0].mxu0
        %v1932 = vadd.f32 %v1883, %v1931
        %v1933 = vpop.f32.mrb[0].mxu0
        %1934 = vmatprep.mubr.bf16.mxu0 %v451
        %1935 = vmatmul.mubr.bf16.gmra.mrb[0].mxu0 %v450
        %v1936 = vpop.f32.mrb[0].mxu0
        %v1937 = vadd.f32 %v1888, %v1936
        %v1938 = vpop.f32.mrb[0].mxu0
        %v1939 = vpop.f32.mrb[0].mxu0
        %v1940 = vadd.f32 %v1891, %v1939
        %v1941 = vpop.f32.mrb[0].mxu0
        %1942 = vdwg.mxu0
        %1943 = vmatprep.subr.bf16.mxu0 0
        %1944 = vmatpush1.bf16.msra.mxu0 %v1444
        %1945 = vmatprep.subr.bf16.mxu0 0
        %1946 = vmatpush1.bf16.msra.mxu0 %v1445
        %1947 = vmatprep.subr.bf16.mxu0 0
        %1948 = vmatpush1.bf16.msra.mxu0 %v1446
        %1949 = vmatprep.subr.bf16.mxu0 0
        %1950 = vmatpush1.bf16.msra.mxu0 %v1447
        %1951 = vmatprep.subr.bf16.mxu0 0
        %1952 = vmatpush1.bf16.msra.mxu0 %v1448
        %1953 = vmatprep.subr.bf16.mxu0 0
        %1954 = vmatpush1.bf16.msra.mxu0 %v1449
        %1955 = vmatprep.subr.bf16.mxu0 0
        %1956 = vmatpush1.bf16.msra.mxu0 %v1450
        %1957 = vmatprep.subr.bf16.mxu0 0
        %1958 = vmatpush1.bf16.msra.mxu0 %v1451
        %1959 = vmatprep.subr.bf16.mxu0 0
        %1960 = vmatpush1.bf16.msra.mxu0 %v1452
        %1961 = vmatprep.subr.bf16.mxu0 0
        %1962 = vmatpush1.bf16.msra.mxu0 %v1453
        %1963 = vmatprep.subr.bf16.mxu0 0
        %1964 = vmatpush1.bf16.msra.mxu0 %v1454
        %1965 = vmatprep.subr.bf16.mxu0 0
        %1966 = vmatpush1.bf16.msra.mxu0 %v1455
        %1967 = vmatprep.subr.bf16.mxu0 0
        %1968 = vmatpush1.bf16.msra.mxu0 %v1456
        %1969 = vmatprep.subr.bf16.mxu0 0
        %1970 = vmatpush1.bf16.msra.mxu0 %v1457
        %1971 = vmatprep.subr.bf16.mxu0 0
        %1972 = vmatpush1.bf16.msra.mxu0 %v1458
        %1973 = vmatprep.subr.bf16.mxu0 0
        %1974 = vmatpush1.bf16.msra.mxu0 %v1459
        %1975 = vmatprep.mubr.bf16.mxu0 %v434
        %1976 = vmatmul.mubr.bf16.gmra.mrb[0].mxu0 %v433
        %v1977 = vpop.f32.mrb[0].mxu0
        %v1978 = vadd.f32 %v1929, %v1977
        %v1979 = vpop.f32.mrb[0].mxu0
        %v1980 = vpop.f32.mrb[0].mxu0
        %v1981 = vadd.f32 %v1932, %v1980
        %v1982 = vpop.f32.mrb[0].mxu0
        %1983 = vmatprep.mubr.bf16.mxu0 %v453
        %1984 = vmatmul.mubr.bf16.gmra.mrb[0].mxu0 %v452
        %v1985 = vpop.f32.mrb[0].mxu0
        %v1986 = vadd.f32 %v1937, %v1985
        %v1987 = vpop.f32.mrb[0].mxu0
        %v1988 = vpop.f32.mrb[0].mxu0
        %v1989 = vadd.f32 %v1940, %v1988
        %v1990 = vpop.f32.mrb[0].mxu0
        %1991 = vdwg.mxu0
        %1992 = vmatprep.subr.bf16.mxu0 0
        %1993 = vmatpush1.bf16.msra.mxu0 %v1460
        %1994 = vmatprep.subr.bf16.mxu0 0
        %1995 = vmatpush1.bf16.msra.mxu0 %v1461
        %1996 = vmatprep.subr.bf16.mxu0 0
        %1997 = vmatpush1.bf16.msra.mxu0 %v1462
        %1998 = vmatprep.subr.bf16.mxu0 0
        %1999 = vmatpush1.bf16.msra.mxu0 %v1463
        %2000 = vmatprep.subr.bf16.mxu0 0
        %2001 = vmatpush1.bf16.msra.mxu0 %v1464
        %2002 = vmatprep.subr.bf16.mxu0 0
        %2003 = vmatpush1.bf16.msra.mxu0 %v1465
        %2004 = vmatprep.subr.bf16.mxu0 0
        %2005 = vmatpush1.bf16.msra.mxu0 %v1466
        %2006 = vmatprep.subr.bf16.mxu0 0
        %2007 = vmatpush1.bf16.msra.mxu0 %v1467
        %2008 = vmatprep.subr.bf16.mxu0 0
        %2009 = vmatpush1.bf16.msra.mxu0 %v1468
        %2010 = vmatprep.subr.bf16.mxu0 0
        %2011 = vmatpush1.bf16.msra.mxu0 %v1469
        %2012 = vmatprep.subr.bf16.mxu0 0
        %2013 = vmatpush1.bf16.msra.mxu0 %v1470
        %2014 = vmatprep.subr.bf16.mxu0 0
        %2015 = vmatpush1.bf16.msra.mxu0 %v1471
        %2016 = vmatprep.subr.bf16.mxu0 0
        %2017 = vmatpush1.bf16.msra.mxu0 %v1472
        %2018 = vmatprep.subr.bf16.mxu0 0
        %2019 = vmatpush1.bf16.msra.mxu0 %v1473
        %2020 = vmatprep.subr.bf16.mxu0 0
        %2021 = vmatpush1.bf16.msra.mxu0 %v1474
        %2022 = vmatprep.subr.bf16.mxu0 0
        %2023 = vmatpush1.bf16.msra.mxu0 %v1475
        %2024 = vmatprep.mubr.bf16.mxu0 %v436
        %2025 = vmatmul.mubr.bf16.gmra.mrb[0].mxu0 %v435
        %v2026 = vpop.f32.mrb[0].mxu0
        %v2027 = vadd.f32 %v1978, %v2026
        %v2028 = vpop.f32.mrb[0].mxu0
        %v2029 = vpop.f32.mrb[0].mxu0
        %v2030 = vadd.f32 %v1981, %v2029
        %v2031 = vpop.f32.mrb[0].mxu0
        %2032 = vmatprep.mubr.bf16.mxu0 %v455
        %2033 = vmatmul.mubr.bf16.gmra.mrb[0].mxu0 %v454
        %v2034 = vpop.f32.mrb[0].mxu0
        %v2035 = vadd.f32 %v1986, %v2034
        %v2036 = vpop.f32.mrb[0].mxu0
        %v2037 = vpop.f32.mrb[0].mxu0
        %v2038 = vadd.f32 %v1989, %v2037
        %v2039 = vpop.f32.mrb[0].mxu0
        %2040 = vdwg.mxu0
        %2041 = vmatprep.subr.bf16.mxu0 0
        %2042 = vmatpush1.bf16.msra.mxu0 %v1476
        %2043 = vmatprep.subr.bf16.mxu0 0
        %2044 = vmatpush1.bf16.msra.mxu0 %v1477
        %2045 = vmatprep.subr.bf16.mxu0 0
        %2046 = vmatpush1.bf16.msra.mxu0 %v1478
        %2047 = vmatprep.subr.bf16.mxu0 0
        %2048 = vmatpush1.bf16.msra.mxu0 %v1479
        %2049 = vmatprep.subr.bf16.mxu0 0
        %2050 = vmatpush1.bf16.msra.mxu0 %v1480
        %2051 = vmatprep.subr.bf16.mxu0 0
        %2052 = vmatpush1.bf16.msra.mxu0 %v1481
        %2053 = vmatprep.subr.bf16.mxu0 0
        %2054 = vmatpush1.bf16.msra.mxu0 %v1482
        %2055 = vmatprep.subr.bf16.mxu0 0
        %2056 = vmatpush1.bf16.msra.mxu0 %v1483
        %2057 = vmatprep.subr.bf16.mxu0 0
        %2058 = vmatpush1.bf16.msra.mxu0 %v1484
        %2059 = vmatprep.subr.bf16.mxu0 0
        %2060 = vmatpush1.bf16.msra.mxu0 %v1485
        %2061 = vmatprep.subr.bf16.mxu0 0
        %2062 = vmatpush1.bf16.msra.mxu0 %v1486
        %2063 = vmatprep.subr.bf16.mxu0 0
        %2064 = vmatpush1.bf16.msra.mxu0 %v1487
        %2065 = vmatprep.subr.bf16.mxu0 0
        %2066 = vmatpush1.bf16.msra.mxu0 %v1488
        %2067 = vmatprep.subr.bf16.mxu0 0
        %2068 = vmatpush1.bf16.msra.mxu0 %v1489
        %2069 = vmatprep.subr.bf16.mxu0 0
        %2070 = vmatpush1.bf16.msra.mxu0 %v1490
        %2071 = vmatprep.subr.bf16.mxu0 0
        %2072 = vmatpush1.bf16.msra.mxu0 %v1491
        %2073 = vmatprep.mubr.bf16.mxu0 %v438
        %2074 = vmatmul.mubr.bf16.gmra.mrb[0].mxu0 %v437
        %v2075 = vpop.f32.mrb[0].mxu0
        %v2076 = vadd.f32 %v2027, %v2075
        %v2077 = vpop.f32.mrb[0].mxu0
        %v2078 = vpop.f32.mrb[0].mxu0
        %v2079 = vadd.f32 %v2030, %v2078
        %v2080 = vpop.f32.mrb[0].mxu0
        %2081 = vmatprep.mubr.bf16.mxu0 %v457
        %2082 = vmatmul.mubr.bf16.gmra.mrb[0].mxu0 %v456
        %v2083 = vpop.f32.mrb[0].mxu0
        %v2084 = vadd.f32 %v2035, %v2083
        %v2085 = vpop.f32.mrb[0].mxu0
        %v2086 = vpop.f32.mrb[0].mxu0
        %v2087 = vadd.f32 %v2038, %v2086
        %v2088 = vpop.f32.mrb[0].mxu0
        %2089 = vdwg.mxu0
        %2090 = vmatprep.subr.bf16.mxu0 0
        %2091 = vmatpush1.bf16.msra.mxu0 %v1492
        %2092 = vmatprep.subr.bf16.mxu0 0
        %2093 = vmatpush1.bf16.msra.mxu0 %v1493
        %2094 = vmatprep.subr.bf16.mxu0 0
        %2095 = vmatpush1.bf16.msra.mxu0 %v1494
        %2096 = vmatprep.subr.bf16.mxu0 0
        %2097 = vmatpush1.bf16.msra.mxu0 0
        %2098 = vmatprep.subr.bf16.mxu0 0
        %2099 = vmatpush1.bf16.msra.mxu0 0
        %2100 = vmatprep.subr.bf16.mxu0 0
        %2101 = vmatpush1.bf16.msra.mxu0 0
        %2102 = vmatprep.subr.bf16.mxu0 0
        %2103 = vmatpush1.bf16.msra.mxu0 0
        %2104 = vmatprep.subr.bf16.mxu0 0
        %2105 = vmatpush1.bf16.msra.mxu0 0
        %2106 = vmatprep.subr.bf16.mxu0 0
        %2107 = vmatpush1.bf16.msra.mxu0 0
        %2108 = vmatprep.subr.bf16.mxu0 0
        %2109 = vmatpush1.bf16.msra.mxu0 0
        %2110 = vmatprep.subr.bf16.mxu0 0
        %2111 = vmatpush1.bf16.msra.mxu0 0
        %2112 = vmatprep.subr.bf16.mxu0 0
        %2113 = vmatpush1.bf16.msra.mxu0 0
        %2114 = vmatprep.subr.bf16.mxu0 0
        %2115 = vmatpush1.bf16.msra.mxu0 0
        %2116 = vmatprep.subr.bf16.mxu0 0
        %2117 = vmatpush1.bf16.msra.mxu0 0
        %2118 = vmatprep.subr.bf16.mxu0 0
        %2119 = vmatpush1.bf16.msra.mxu0 0
        %2120 = vmatprep.subr.bf16.mxu0 0
        %2121 = vmatpush1.bf16.msra.mxu0 0
        %2122 = vmatprep.mubr.bf16.mxu0 0
        %2123 = vmatmul.mubr.bf16.gmra.mrb[0].mxu0 %v1644
        %v2124 = vpop.f32.mrb[0].mxu0
        %v2125 = vadd.f32 %v2076, %v2124
        %v2126 = vpop.f32.mrb[0].mxu0
        %v2127 = vpop.f32.mrb[0].mxu0
        %v2128 = vadd.f32 %v2079, %v2127
        %v2129 = vpop.f32.mrb[0].mxu0
        %2130 = vmatprep.mubr.bf16.mxu0 0
        %2131 = vmatmul.mubr.bf16.gmra.mrb[0].mxu0 %v1647
        %v2132 = vpop.f32.mrb[0].mxu0
        %v2133 = vadd.f32 %v2084, %v2132
        %v2134 = vpop.f32.mrb[0].mxu0
        %v2135 = vpop.f32.mrb[0].mxu0
        %v2136 = vadd.f32 %v2087, %v2135
        %v2137 = vpop.f32.mrb[0].mxu0
        %2138 = vdwg.mxu0
        %v2139 = vmax.f32 %v2125, 0.0
        %v2140 = vmax.f32 %v2128, 0.0
        %v2141 = vmax.f32 %v2133, 0.0
        %v2142 = vmax.f32 %v2136, 0.0
        %v2143 = vpack.c.bf16 %v2140, %v2139
        %v2144 = vpack.c.bf16 %v2142, %v2141
        %v2145 = vld [vmem:[#allocation7] sm:$0xf]
        %v2146 = vld [vmem:[#allocation7 + $0x4] sm:$0xf]
        %v2147 = vld [vmem:[#allocation7 + $0x8] sm:$0xf]
        %v2148 = vld [vmem:[#allocation7 + $0xc] sm:$0xf]
        %v2149 = vld [vmem:[#allocation7 + $0x10] sm:$0xf]
        %v2150 = vld [vmem:[#allocation7 + $0x14] sm:$0xf]
        %v2151 = vld [vmem:[#allocation7 + $0x18] sm:$0xf]
        %v2152 = vld [vmem:[#allocation7 + $0x1c] sm:$0xf]
        %v2153 = vld [vmem:[#allocation7 + $0x20] sm:$0xf]
        %v2154 = vld [vmem:[#allocation7 + $0x24] sm:$0xf]
        %v2155 = vld [vmem:[#allocation7 + $0x28] sm:$0xf]
        %v2156 = vld [vmem:[#allocation7 + $0x2c] sm:$0xf]
        %v2157 = vld [vmem:[#allocation7 + $0x30] sm:$0xf]
        %v2158 = vld [vmem:[#allocation7 + $0x34] sm:$0xf]
        %v2159 = vld [vmem:[#allocation7 + $0x38] sm:$0xf]
        %v2160 = vld [vmem:[#allocation7 + $0x3c] sm:$0xf]
        %v2161 = vld [vmem:[%s4] sm:$0x1]
        %v2163 = vlaneseq
        %v2164 = vshrl.u32 %v2163, 7
        %v2165 = vsub.s32 0, %v2164
        %v2166 = vrot.slane %v2161, %v2165
        %v2184 = vunpack.c.l.b16 %v2145
        %v2185 = vunpack.c.l.b16 %v2146
        %v2186 = vunpack.c.l.b16 %v2147
        %v2187 = vunpack.c.l.b16 %v2148
        %v2188 = vunpack.c.l.b16 %v2149
        %v2189 = vunpack.c.l.b16 %v2150
        %v2190 = vunpack.c.l.b16 %v2151
        %v2191 = vunpack.c.l.b16 %v2152
        %v2192 = vunpack.c.l.b16 %v2153
        %v2193 = vunpack.c.l.b16 %v2154
        %v2194 = vunpack.c.l.b16 %v2155
        %v2195 = vunpack.c.l.b16 %v2156
        %v2196 = vunpack.c.l.b16 %v2157
        %v2197 = vunpack.c.l.b16 %v2158
        %v2198 = vunpack.c.l.b16 %v2159
        %v2199 = vunpack.c.l.b16 %v2160
        %v2200 = vpack.c.b16 %v2185, %v2184
        %v2201 = vpack.c.b16 %v2187, %v2186
        %v2202 = vpack.c.b16 %v2189, %v2188
        %v2203 = vpack.c.b16 %v2191, %v2190
        %v2204 = vpack.c.b16 %v2193, %v2192
        %v2205 = vpack.c.b16 %v2195, %v2194
        %v2206 = vpack.c.b16 %v2197, %v2196
        %v2207 = vpack.c.b16 %v2199, %v2198
        %2216 = vmatprep.subr.bf16.mxu0 0
        %2217 = vmatpush1.bf16.msra.mxu0 %v2200
        %2218 = vmatprep.subr.bf16.mxu0 0
        %2219 = vmatpush1.bf16.msra.mxu0 %v2201
        %2220 = vmatprep.subr.bf16.mxu0 0
        %2221 = vmatpush1.bf16.msra.mxu0 %v2202
        %2222 = vmatprep.subr.bf16.mxu0 0
        %2223 = vmatpush1.bf16.msra.mxu0 %v2203
        %2224 = vmatprep.subr.bf16.mxu0 0
        %2225 = vmatpush1.bf16.msra.mxu0 %v2204
        %2226 = vmatprep.subr.bf16.mxu0 0
        %2227 = vmatpush1.bf16.msra.mxu0 %v2205
        %2228 = vmatprep.subr.bf16.mxu0 0
        %2229 = vmatpush1.bf16.msra.mxu0 %v2206
        %2230 = vmatprep.subr.bf16.mxu0 0
        %2231 = vmatpush1.bf16.msra.mxu0 %v2207
        %2232 = vmatprep.subr.bf16.mxu0 0
        %2233 = vmatpush1.bf16.msra.mxu0 0
        %2234 = vmatprep.subr.bf16.mxu0 0
        %2235 = vmatpush1.bf16.msra.mxu0 0
        %2236 = vmatprep.subr.bf16.mxu0 0
        %2237 = vmatpush1.bf16.msra.mxu0 0
        %2238 = vmatprep.subr.bf16.mxu0 0
        %2239 = vmatpush1.bf16.msra.mxu0 0
        %2240 = vmatprep.subr.bf16.mxu0 0
        %2241 = vmatpush1.bf16.msra.mxu0 0
        %2242 = vmatprep.subr.bf16.mxu0 0
        %2243 = vmatpush1.bf16.msra.mxu0 0
        %2244 = vmatprep.subr.bf16.mxu0 0
        %2245 = vmatpush1.bf16.msra.mxu0 0
        %2246 = vmatprep.subr.bf16.mxu0 0
        %2247 = vmatpush1.bf16.msra.mxu0 0
        %2248 = vmatprep.mubr.bf16.mxu0 0
        %2249 = vmatmul.mubr.bf16.gmra.mrb[0].mxu0 %v2143
        %v2250 = vpop.f32.mrb[0].mxu0
        %v2251 = vadd.f32 %v2166, %v2250
        %v2252 = vpop.f32.mrb[0].mxu0
        %v2253 = vpop.f32.mrb[0].mxu0
        %v2254 = vadd.f32 %v2166, %v2253
        %v2255 = vpop.f32.mrb[0].mxu0
        %2256 = vmatprep.mubr.bf16.mxu0 0
        %2257 = vmatmul.mubr.bf16.gmra.mrb[0].mxu0 %v2144
        %v2258 = vpop.f32.mrb[0].mxu0
        %v2259 = vadd.f32 %v2166, %v2258
        %v2260 = vpop.f32.mrb[0].mxu0
        %v2261 = vpop.f32.mrb[0].mxu0
        %v2262 = vadd.f32 %v2166, %v2261
        %v2263 = vpop.f32.mrb[0].mxu0
        %2264 = vdwg.mxu0
        %v2265 = vmax.f32 %v2251, 0.0
        %v2266 = vmax.f32 %v2254, 0.0
        %v2267 = vmax.f32 %v2259, 0.0
        %v2268 = vmax.f32 %v2262, 0.0
        %v2269 = vpack.c.bf16 %v2266, %v2265
        %v2270 = vpack.c.bf16 %v2268, %v2267
        %v2271 = vld [vmem:[#allocation8] sm:$0xf]
        %v2272 = vld [vmem:[#allocation8 + $0x4] sm:$0xf]
        %v2273 = vld [vmem:[#allocation8 + $0x8] sm:$0xf]
        %v2274 = vld [vmem:[#allocation8 + $0xc] sm:$0xf]
        %v2275 = vld [vmem:[#allocation8 + $0x10] sm:$0xf]
        %v2276 = vld [vmem:[#allocation8 + $0x14] sm:$0xf]
        %v2277 = vld [vmem:[#allocation8 + $0x18] sm:$0xf]
        %v2278 = vld [vmem:[#allocation8 + $0x1c] sm:$0xf]
        %v2279 = vld [vmem:[#allocation8 + $0x20] sm:$0xf]
        %v2280 = vld [vmem:[#allocation8 + $0x24] sm:$0xf]
        %v2281 = vld [vmem:[#allocation8 + $0x28] sm:$0xf]
        %v2282 = vld [vmem:[#allocation8 + $0x2c] sm:$0xf]
        %v2283 = vld [vmem:[#allocation8 + $0x30] sm:$0xf]
        %v2284 = vld [vmem:[#allocation8 + $0x34] sm:$0xf]
        %v2285 = vld [vmem:[#allocation8 + $0x38] sm:$0xf]
        %v2286 = vld [vmem:[#allocation8 + $0x3c] sm:$0xf]
        %v2287 = vld [vmem:[%s6] sm:$0x1]
        %v2289 = vlaneseq
        %v2290 = vshrl.u32 %v2289, 7
        %v2291 = vsub.s32 0, %v2290
        %v2292 = vrot.slane %v2287, %v2291
        %v2310 = vunpack.c.l.b16 %v2271
        %v2311 = vunpack.c.l.b16 %v2272
        %v2312 = vunpack.c.l.b16 %v2273
        %v2313 = vunpack.c.l.b16 %v2274
        %v2314 = vunpack.c.l.b16 %v2275
        %v2315 = vunpack.c.l.b16 %v2276
        %v2316 = vunpack.c.l.b16 %v2277
        %v2317 = vunpack.c.l.b16 %v2278
        %v2318 = vunpack.c.l.b16 %v2279
        %v2319 = vunpack.c.l.b16 %v2280
        %v2320 = vunpack.c.l.b16 %v2281
        %v2321 = vunpack.c.l.b16 %v2282
        %v2322 = vunpack.c.l.b16 %v2283
        %v2323 = vunpack.c.l.b16 %v2284
        %v2324 = vunpack.c.l.b16 %v2285
        %v2325 = vunpack.c.l.b16 %v2286
        %v2326 = vpack.c.b16 %v2311, %v2310
        %v2327 = vpack.c.b16 %v2313, %v2312
        %v2328 = vpack.c.b16 %v2315, %v2314
        %v2329 = vpack.c.b16 %v2317, %v2316
        %v2330 = vpack.c.b16 %v2319, %v2318
        %v2331 = vpack.c.b16 %v2321, %v2320
        %v2332 = vpack.c.b16 %v2323, %v2322
        %v2333 = vpack.c.b16 %v2325, %v2324
        %2342 = vmatprep.subr.bf16.mxu0 0
        %2343 = vmatpush1.bf16.msra.mxu0 %v2326
        %2344 = vmatprep.subr.bf16.mxu0 0
        %2345 = vmatpush1.bf16.msra.mxu0 %v2327
        %2346 = vmatprep.subr.bf16.mxu0 0
        %2347 = vmatpush1.bf16.msra.mxu0 %v2328
        %2348 = vmatprep.subr.bf16.mxu0 0
        %2349 = vmatpush1.bf16.msra.mxu0 %v2329
        %2350 = vmatprep.subr.bf16.mxu0 0
        %2351 = vmatpush1.bf16.msra.mxu0 %v2330
        %2352 = vmatprep.subr.bf16.mxu0 0
        %2353 = vmatpush1.bf16.msra.mxu0 %v2331
        %2354 = vmatprep.subr.bf16.mxu0 0
        %2355 = vmatpush1.bf16.msra.mxu0 %v2332
        %2356 = vmatprep.subr.bf16.mxu0 0
        %2357 = vmatpush1.bf16.msra.mxu0 %v2333
        %2358 = vmatprep.subr.bf16.mxu0 0
        %2359 = vmatpush1.bf16.msra.mxu0 0
        %2360 = vmatprep.subr.bf16.mxu0 0
        %2361 = vmatpush1.bf16.msra.mxu0 0
        %2362 = vmatprep.subr.bf16.mxu0 0
        %2363 = vmatpush1.bf16.msra.mxu0 0
        %2364 = vmatprep.subr.bf16.mxu0 0
        %2365 = vmatpush1.bf16.msra.mxu0 0
        %2366 = vmatprep.subr.bf16.mxu0 0
        %2367 = vmatpush1.bf16.msra.mxu0 0
        %2368 = vmatprep.subr.bf16.mxu0 0
        %2369 = vmatpush1.bf16.msra.mxu0 0
        %2370 = vmatprep.subr.bf16.mxu0 0
        %2371 = vmatpush1.bf16.msra.mxu0 0
        %2372 = vmatprep.subr.bf16.mxu0 0
        %2373 = vmatpush1.bf16.msra.mxu0 0
        %2374 = vmatprep.mubr.bf16.mxu0 0
        %2375 = vmatmul.mubr.bf16.gmra.mrb[0].mxu0 %v2269
        %v2376 = vpop.f32.mrb[0].mxu0
        %v2377 = vadd.f32 %v2292, %v2376
        %v2378 = vpop.f32.mrb[0].mxu0
        %v2379 = vpop.f32.mrb[0].mxu0
        %v2380 = vadd.f32 %v2292, %v2379
        %v2381 = vpop.f32.mrb[0].mxu0
        %2382 = vmatprep.mubr.bf16.mxu0 0
        %2383 = vmatmul.mubr.bf16.gmra.mrb[0].mxu0 %v2270
        %v2384 = vpop.f32.mrb[0].mxu0
        %v2385 = vadd.f32 %v2292, %v2384
        %v2386 = vpop.f32.mrb[0].mxu0
        %v2387 = vpop.f32.mrb[0].mxu0
        %v2388 = vadd.f32 %v2292, %v2387
        %v2389 = vpop.f32.mrb[0].mxu0
        %2390 = vdwg.mxu0
        %v2391 = vlaneseq
        %v2392 = vand.u32 %v2391, 127
        %vm2393 = vcmp.lt.s32.totalorder %v2392, 10
        %v2394 = vsel %vm2393, %v2377, -1e+30
        %v2395 = vsel %vm2393, %v2380, -1e+30
        %v2396 = vsel %vm2393, %v2385, -1e+30
        %v2397 = vsel %vm2393, %v2388, -1e+30
        %2398 = vmax.xlane.f32.xlu0 %v2394
        %v2399 = vpop.xlane.xlu0 %2398
        %2400 = vmax.xlane.f32.xlu0 %v2395
        %v2401 = vpop.xlane.xlu0 %2400
        %2402 = vmax.xlane.f32.xlu0 %v2396
        %v2403 = vpop.xlane.xlu0 %2402
        %2404 = vmax.xlane.f32.xlu0 %v2397
        %v2405 = vpop.xlane.xlu0 %2404
        %v2406 = vsub.f32 %v2394, %v2399
        %v2407 = vsub.f32 %v2395, %v2401
        %v2408 = vsub.f32 %v2396, %v2403
        %v2409 = vsub.f32 %v2397, %v2405
        %v2410 = vmul.f32 %v2406, 1.442695
        %v2411 = vpow.pop %v2410
        %v2412 = vmul.f32 %v2407, 1.442695
        %v2413 = vpow.pop %v2412
        %v2414 = vmul.f32 %v2408, 1.442695
        %v2415 = vpow.pop %v2414
        %v2416 = vmul.f32 %v2409, 1.442695
        %v2417 = vpow.pop %v2416
        %2418 = vadd.xlane.f32.xlu0 %v2411
        %v2419 = vpop.xlane.xlu0 %2418
        %2420 = vadd.xlane.f32.xlu0 %v2413
        %v2421 = vpop.xlane.xlu0 %2420
        %2422 = vadd.xlane.f32.xlu0 %v2415
        %v2423 = vpop.xlane.xlu0 %2422
        %2424 = vadd.xlane.f32.xlu0 %v2417
        %v2425 = vpop.xlane.xlu0 %2424
        %v2426 = vrcp.pop %v2419
        %v2427 = vmul.f32 %v2411, %v2426
        %v2428 = vrcp.pop %v2421
        %v2429 = vmul.f32 %v2413, %v2428
        %v2430 = vrcp.pop %v2423
        %v2431 = vmul.f32 %v2415, %v2430
        %v2432 = vrcp.pop %v2425
        %v2433 = vmul.f32 %v2417, %v2432
        %2434 = vst [vmem:[%s341] sm:$0xff] %v2427
        %2435 = vst [vmem:[%s341 + $0x8] sm:$0xff] %v2429
        %2436 = vst [vmem:[%s341 + $0x10] sm:$0xff] %v2431
        %2437 = vst [vmem:[%s341 + $0x18] sm:$0xff] %v2433
        %s2438 = sand.u32 %s186, 1
        %s2439 = scalar_lea.sflag [#allocation4], %s2438
        %s2440 = sand.u32 %s186, 1
        %s2441 = smul.addr %s2440, 32
        %s2442 = scalar_lea.vmem [#allocation10], %s2441
        // Predicated region
        $region65: #{tpu_custom_call.1} parent=47 // pred_check
          %p2443 = pneg %p196
        $region66: #{tpu_custom_call.1} parent=47 // pred_check_branch
          %2445 = sbr.rel (%p2443) target = $region68
        $region67: #{tpu_custom_call.1} parent=47 // pred_region
          %s2446 = smul.u32 4, %s26
          %s2448 = ssub.s32 512, 512
          %2449 = vsyncadd %s2439, %s2448
          %s2450 = smul.addr %s2446, 128
          %s2451 = scalar_lea.hbm %s7, %s2450
          %s2452 = sshll.u32 %s2442, 4
          %s2453 = int_to_ptr.vmem [resolvable:$true] %s2452
          %2458 = dma.vmem_to_hbm [thread:$0]  %s2453, 512, %s2451, %s2439, 128, 128, 8
        $region68: #{tpu_custom_call.1} parent=47 // pred_fallthru
          _
      $region48: #{tpu_custom_call.1} parent=5 // pred_fallthru
        _
      %p2459 = scmp.le.s32.totalorder 2, %s21
      // Predicated region
      $region69: #{tpu_custom_call.1} parent=5 // pred_check
        %p2460 = pneg %p2459
      $region70: #{tpu_custom_call.1} parent=5 // pred_check_branch
        %2462 = sbr.rel (%p2460) target = $region72
      $region71: #{tpu_custom_call.1} parent=5 // pred_region
        %s2463 = ssub.s32 %s21, 2
        // Predicated region
        $region73: #{tpu_custom_call.1} parent=71 // pred_check
          %p2464 = pneg %p202
        $region74: #{tpu_custom_call.1} parent=71 // pred_check_branch
          %2466 = sbr.rel (%p2464) target = $region76
        $region75: #{tpu_custom_call.1} parent=71 // pred_region
          %s2467 = sand.u32 %s187, 1
          %s2468 = scalar_lea.sflag [#allocation4], %s2467
          %s2469 = sand.u32 %s187, 1
          %s2470 = smul.addr %s2469, 32
          %s2471 = scalar_lea.vmem [#allocation10], %s2470
          %2472 = dma.done %s2468, 512
        $region76: #{tpu_custom_call.1} parent=71 // pred_fallthru
          _
      $region72: #{tpu_custom_call.1} parent=5 // pred_fallthru
        _
    $region6: #{tpu_custom_call.1} parent=1 // loop_footer
      %s25 = sadd.s32 1, %s21
    $region7: #{tpu_custom_call.1} parent=1 // loop_footer_branch
      %20 = sbr.rel target = $region3
    $region8: #{tpu_custom_call.1} parent=1 // loop_exit
      _
    %2473 = vsyncpa [#allocation3], 1
    %s2474 = scalar_lea.sflag [#allocation3], 1
    %2475 = vsyncpa %s2474, 1
    %2476 = vsyncpa [#allocation6], 1
    %2477 = vsyncpa [#allocation9], 1
    %2478 = vsyncpa [#allocation4], 1
    %s2479 = scalar_lea.sflag [#allocation4], 1
    %2480 = vsyncpa %s2479, 1

</llo_original>
